<compile_context>
chip_gen: v7x
topology: tpu7x:2x2x1
jax: 0.10.0
libtpu: 0.0.40
codegen_flags: <defaults>
</compile_context>

<pallas_src>
import math
from functools import partial

import numpy as np
import jax
import jax.numpy as jnp
from jax.experimental import pallas as pl
from jax.experimental.pallas import tpu as pltpu

_VMEM = pl.BlockSpec(memory_space=pltpu.MemorySpace.VMEM)
_SMEM = pl.BlockSpec(memory_space=pltpu.MemorySpace.SMEM)


# ---------------------------------------------------------------------------
# weight packing (done once, outside the kernel)
# ---------------------------------------------------------------------------
def _pack_lane_aligned(mats, lane=128):
    """Concatenate 2-D arrays along axis 1, padding each segment to a multiple
    of `lane` so in-kernel slices start at lane-aligned offsets."""
    segs, starts, pos = [], [], 0
    for m in mats:
        w = m.shape[1]
        pw = ((w + lane - 1) // lane) * lane
        segs.append(jnp.pad(m, ((0, 0), (0, pw - w))))
        starts.append(pos)
        pos += pw
    return jnp.concatenate(segs, axis=1), tuple(starts)


def pack_params(params):
    """Pack the raw (torch-layout, pre-transposed) params into kernel form."""
    H = params["whh_t"].shape[0]
    A = params["wq_t"].shape[1]
    Ho = params["wv_t"].shape[1]

    wih, bih = params["wih_t"], params["bih"]
    w_co, co_offs = _pack_lane_aligned(
        [wih[:, :H], wih[:, H:2 * H], wih[:, 2 * H:], params["wk_t"], params["wv_t"]])
    b_co, _ = _pack_lane_aligned(
        [bih[:, :H], bih[:, H:2 * H], bih[:, 2 * H:], params["bk"], params["bv"]])

    whh, bhh = params["whh_t"], params["bhh"]
    whh_pk, hh_offs = _pack_lane_aligned([whh[:, :H], whh[:, H:2 * H], whh[:, 2 * H:]])
    bhh_pk, _ = _pack_lane_aligned([bhh[:, :H], bhh[:, H:2 * H], bhh[:, 2 * H:]])

    return dict(w_co=w_co, b_co=b_co, whh=whh_pk, bhh=bhh_pk,
                wq=params["wq_t"], bq=params["bq"],
                H=H, A=A, Ho=Ho, co_offs=co_offs, hh_offs=hh_offs)


# ---------------------------------------------------------------------------
# in-kernel compute helpers
# ---------------------------------------------------------------------------
def _gru_from_packed(cx, h, whh, bhh, H, co_offs, hh_offs):
    """PyTorch nn.GRUCell semantics (gate order r, z, n).

    `cx` already holds x@W_ih + b_ih in 128-lane-aligned segments.
    Default MXU precision (bf16 operands, f32 accumulate)."""
    gh = jnp.dot(h, whh, preferred_element_type=jnp.float32) + bhh
    r = jax.nn.sigmoid(cx[:, co_offs[0]:co_offs[0] + H] + gh[:, hh_offs[0]:hh_offs[0] + H])
    z = jax.nn.sigmoid(cx[:, co_offs[1]:co_offs[1] + H] + gh[:, hh_offs[1]:hh_offs[1] + H])
    n = jnp.tanh(cx[:, co_offs[2]:co_offs[2] + H]
                 + r * gh[:, hh_offs[2]:hh_offs[2] + H])
    return (1.0 - z) * n + z * h


def _col_to_row(col):
    """(N,1) -> (1,N) using iota-select + sublane reduce (avoids tiny-shape
    transpose lowering)."""
    n = col.shape[0]
    eye = (jax.lax.broadcasted_iota(jnp.int32, (n, n), 0)
           == jax.lax.broadcasted_iota(jnp.int32, (n, n), 1))
    return jnp.sum(jnp.where(eye, col, 0.0), axis=0, keepdims=True)


# ---------------------------------------------------------------------------
# kernels
# ---------------------------------------------------------------------------
def _transition_kernel(t_ref, co_ref, no_ref, un_ref, h_ref, div_ref,
                       wco_ref, bco_ref, whh_ref, bhh_ref, wq_ref, bq_ref,
                       out_ref, hnew_ref, *, H, A, Ho, co_offs, hh_offs):
    co = co_ref[...]
    h0 = h_ref[...]
    div = div_ref[...]                       # (N, 3)
    tg = t_ref[0, 0]                         # scalar in {0.0, 1.0}
    neg = jnp.float32(-1e30)

    # ---- masks computed in-kernel (perf review: fewer tiny DMA'd inputs) ----
    m1 = (div[:, 0:1] > 0).astype(jnp.float32)            # (N, 1)
    m2 = (div[:, 1:2] > 0).astype(jnp.float32) * tg
    m3 = (div[:, 2:3] > 0).astype(jnp.float32) * tg
    m23 = jnp.maximum(m2, m3)                              # (N, 1)
    m23_row = _col_to_row(m23)                             # (1, N) key mask

    # ---- one fused MXU contraction for everything with `co` as LHS ----------
    #   cx = [gx_r | gx_z | gx_n | K | V], segments 128-lane aligned
    cx = jnp.dot(co, wco_ref[...], preferred_element_type=jnp.float32) + bco_ref[...]

    # ---- GRU branch (dense; masked to m1 rows afterwards) -------------------
    h_m1 = _gru_from_packed(cx, h0, whh_ref[...], bhh_ref[...], H, co_offs, hh_offs)

    # ---- single-head attention branch over the m2|m3 subset -----------------
    k = cx[:, co_offs[3]:co_offs[3] + A]
    v = cx[:, co_offs[4]:co_offs[4] + Ho]
    q_in = m2 * no_ref[...] + m3 * un_ref[...]             # no_emb on m2, unrelated on m3
    q = jnp.dot(q_in, wq_ref[...], preferred_element_type=jnp.float32) + bq_ref[...]

    scores = jax.lax.dot_general(q, k, (((1,), (1,)), ((), ())),
                                 preferred_element_type=jnp.float32)
    scores = scores * jnp.float32(1.0 / math.sqrt(A))
    scores = jnp.where(m23_row > 0, scores, neg)           # keys restricted to m2|m3
    smax = jnp.max(scores, axis=-1, keepdims=True)
    e = jnp.exp(scores - smax)
    denom = jnp.sum(e, axis=-1, keepdims=True)
    denom = jnp.where(denom > 0, denom, 1.0)
    attn = e * pl.reciprocal(denom, approx=True)           # EUP vrcp (free slot)
    h_m23 = jnp.tanh(jnp.dot(attn, v, preferred_element_type=jnp.float32))

    # ---- scatter h_new: m2/m3 overwrite m1, untouched rows stay zero --------
    hnew = jnp.where(m23 > 0, h_m23, jnp.where(m1 > 0, h_m1, 0.0))
    hnew_ref[...] = hnew.astype(hnew_ref.dtype)

    # ---- branch-wise max over selected rows, combined elementwise max -------
    out_m1 = jnp.max(jnp.where(m1 > 0, h_m1, neg), axis=0, keepdims=True)
    out_m23 = jnp.max(jnp.where(m23 > 0, h_m23, neg), axis=0, keepdims=True)
    out = jnp.maximum(out_m1, out_m23)
    nsel = jnp.sum(m1) + jnp.sum(m23)
    out_ref[...] = jnp.where(nsel > 0, out, 0.0).astype(out_ref.dtype)


def _gru_only_kernel(co_ref, h_ref, wco_ref, bco_ref, whh_ref, bhh_ref, out_ref,
                     *, H, co_offs, hh_offs):
    cx = jnp.dot(co_ref[...], wco_ref[...],
                 preferred_element_type=jnp.float32) + bco_ref[...]
    out_ref[...] = _gru_from_packed(cx, h_ref[...], whh_ref[...], bhh_ref[...],
                                    H, co_offs, hh_offs).astype(out_ref.dtype)


# ---------------------------------------------------------------------------
# wrapper (glue: None handling, pallas_call plumbing)
# ---------------------------------------------------------------------------
def transition_layer_no_time(packed, interval, t, co_embeddings, divided,
                             no_embeddings, unrelated_embeddings, is_last,
                             hidden_state=None):
    # `interval` is unused by the no-time variant (matches the torch module).
    del interval
    N, _ = co_embeddings.shape
    H, A, Ho = packed["H"], packed["A"], packed["Ho"]
    co_offs, hh_offs = packed["co_offs"], packed["hh_offs"]
    dtype = co_embeddings.dtype
    if hidden_state is None:
        hidden_state = jnp.zeros((N, H), dtype)

    if is_last:
        out = pl.pallas_call(
            partial(_gru_only_kernel, H=H, co_offs=co_offs, hh_offs=hh_offs),
            out_shape=jax.ShapeDtypeStruct((N, H), dtype),
            in_specs=[_VMEM] * 6,
            out_specs=_VMEM,
        )(co_embeddings, hidden_state, packed["w_co"], packed["b_co"],
          packed["whh"], packed["bhh"])
        return out, None

    # t is a plain Python scalar (as in torch); passed as an SMEM scalar so the
    # same compiled kernel serves every time step.
    t_gate = jnp.full((1, 1), 1.0 if t > 0 else 0.0, jnp.float32)

    out, h_new = pl.pallas_call(
        partial(_transition_kernel, H=H, A=A, Ho=Ho,
                co_offs=co_offs, hh_offs=hh_offs),
        out_shape=(jax.ShapeDtypeStruct((1, H), dtype),
                   jax.ShapeDtypeStruct((N, H), dtype)),
        in_specs=[_SMEM] + [_VMEM] * 11,
        out_specs=(_VMEM, _VMEM),
    )(t_gate, co_embeddings, no_embeddings, unrelated_embeddings, hidden_state,
      jnp.asarray(divided, jnp.float32),
      packed["w_co"], packed["b_co"], packed["whh"], packed["bhh"],
      packed["wq"], packed["bq"])
    return out[0], h_new


# ---------------------------------------------------------------------------
# deterministic parameter initialization (synthetic; shapes from __init__)
# ---------------------------------------------------------------------------
def init_params(key, graph_size, hidden_size, t_attention_size, t_output_size):
    ks = jax.random.split(key, 10)

    def u(k, shape, bound):
        return jax.random.uniform(k, shape, jnp.float32, -bound, bound)

    bg = 1.0 / math.sqrt(hidden_size)   # GRUCell init bound
    bl = 1.0 / math.sqrt(graph_size)    # Linear init bound
    return {
        # nn.GRUCell(graph_size, hidden_size), stored transposed
        "wih_t": u(ks[0], (graph_size, 3 * hidden_size), bg),
        "whh_t": u(ks[1], (hidden_size, 3 * hidden_size), bg),
        "bih":   u(ks[2], (1, 3 * hidden_size), bg),
        "bhh":   u(ks[3], (1, 3 * hidden_size), bg),
        # SingleHeadAttentionLayer(graph_size, graph_size, t_output_size, t_attention_size)
        "wq_t":  u(ks[4], (graph_size, t_attention_size), bl),
        "bq":    u(ks[5], (1, t_attention_size), bl),
        "wk_t":  u(ks[6], (graph_size, t_attention_size), bl),
        "bk":    u(ks[7], (1, t_attention_size), bl),
        "wv_t":  u(ks[8], (graph_size, t_output_size), bl),
        "bv":    u(ks[9], (1, t_output_size), bl),
    }


# ---------------------------------------------------------------------------
# numpy reference implementing the torch forward verbatim (gather/scatter form)
# ---------------------------------------------------------------------------
def _sigmoid(x):
    return 1.0 / (1.0 + np.exp(-x))


def ref_forward(params, t, co, divided, no_e, un_e, is_last, hidden_state=None):
    p = {k: np.asarray(v, np.float64) for k, v in params.items()}
    co, no_e, un_e = (np.asarray(a, np.float64) for a in (co, no_e, un_e))
    N = co.shape[0]
    H = p["whh_t"].shape[0]
    h_prev = np.zeros((N, H)) if hidden_state is None else np.asarray(hidden_state, np.float64)

    def gru(x, h):
        gx = x @ p["wih_t"] + p["bih"]
        gh = h @ p["whh_t"] + p["bhh"]
        r = _sigmoid(gx[:, :H] + gh[:, :H])
        z = _sigmoid(gx[:, H:2 * H] + gh[:, H:2 * H])
        n = np.tanh(gx[:, 2 * H:] + r * gh[:, 2 * H:])
        return (1.0 - z) * n + z * h

    if is_last:
        return gru(co, h_prev), None

    def sha(q, k, v):
        Q = q @ p["wq_t"] + p["bq"]
        K = k @ p["wk_t"] + p["bk"]
        V = v @ p["wv_t"] + p["bv"]
        g = (Q @ K.T) / math.sqrt(p["wq_t"].shape[1])
        g = g - g.max(axis=-1, keepdims=True)
        s = np.exp(g)
        s = s / s.sum(axis=-1, keepdims=True)
        return s @ V

    divided = np.asarray(divided)
    m1_idx = np.where(divided[:, 0] > 0)[0]
    m2_idx = np.where(divided[:, 1] > 0)[0]
    m3_idx = np.where(divided[:, 2] > 0)[0]
    h_new = np.zeros((N, H))
    output_m1 = None
    output_m23 = None
    if len(m1_idx) > 0:
        h_m1 = gru(co[m1_idx], h_prev[m1_idx])
        h_new[m1_idx] = h_m1
        output_m1 = h_m1.max(axis=-2)
    if t > 0 and len(m2_idx) + len(m3_idx) > 0:
        q = np.vstack([no_e[m2_idx], un_e[m3_idx]])
        v = np.vstack([co[m2_idx], co[m3_idx]])
        h_m23 = np.tanh(sha(q, v, v))
        h_new[m2_idx] = h_m23[:len(m2_idx)]
        h_new[m3_idx] = h_m23[len(m2_idx):]
        output_m23 = h_m23.max(axis=-2)
    if len(m1_idx) == 0:
        output = output_m23
    elif output_m23 is None:
        output = output_m1
    else:
        output = np.vstack([output_m1, output_m23]).max(axis=-2)
    return output, h_new


# ---------------------------------------------------------------------------
if __name__ == "__main__":
    code_num, graph_size, hidden_size = 16, 32, 32
    t_attention_size, t_output_size = 16, 32     # t_output_size must equal hidden_size

    key = jax.random.PRNGKey(0)
    pkey, dkey = jax.random.split(key)
    params = init_params(pkey, graph_size, hidden_size, t_attention_size, t_output_size)
    packed = pack_params(params)                 # done once; kernel-ready weights

    ks = jax.random.split(dkey, 4)
    co = jax.random.normal(ks[0], (code_num, graph_size), jnp.float32)
    no_e = jax.random.normal(ks[1], (code_num, graph_size), jnp.float32)
    un_e = jax.random.normal(ks[2], (code_num, graph_size), jnp.float32)
    hidden = jax.random.normal(ks[3], (code_num, hidden_size), jnp.float32)

    divided_np = np.zeros((code_num, 3), np.float32)
    divided_np[0:6, 0] = 1.0    # m1 rows
    divided_np[6:11, 1] = 1.0   # m2 rows
    divided_np[11:15, 2] = 1.0  # m3 rows (row 15 in no group)
    divided = jnp.asarray(divided_np)

    interval, t = None, 3

    # Matmuls now run at default MXU precision (single-pass bf16, f32 accumulate)
    # per the perf review, so the tolerance vs. the float64 reference is relaxed.
    ATOL = RTOL = 2e-2

    # --- non-last step ---
    out, h_new = transition_layer_no_time(packed, interval, t, co, divided,
                                          no_e, un_e, is_last=False, hidden_state=hidden)
    jax.block_until_ready((out, h_new))

    ref_out, ref_h = ref_forward(params, t, np.asarray(co), divided_np,
                                 np.asarray(no_e), np.asarray(un_e), False, np.asarray(hidden))
    np.testing.assert_allclose(np.asarray(out), ref_out, atol=ATOL, rtol=RTOL)
    np.testing.assert_allclose(np.asarray(h_new), ref_h, atol=ATOL, rtol=RTOL)

    # --- last step (GRU over all codes, h_new is None) ---
    out_last, h_last = transition_layer_no_time(packed, interval, t, co, divided,
                                                no_e, un_e, is_last=True, hidden_state=hidden)
    jax.block_until_ready(out_last)
    ref_out_last, _ = ref_forward(params, t, np.asarray(co), divided_np,
                                  np.asarray(no_e), np.asarray(un_e), True, np.asarray(hidden))
    np.testing.assert_allclose(np.asarray(out_last), ref_out_last, atol=ATOL, rtol=RTOL)
    assert h_last is None

    print("KERNEL_OK")
</pallas_src>

<mosaic_0001>
module attributes {stable_mosaic.version = 11 : i64} {
  func.func @_transition_kernel(%arg0: memref<1x1xf32, #tpu.memory_space<smem>>, %arg1: memref<16x32xf32, #tpu.memory_space<vmem>>, %arg2: memref<16x32xf32, #tpu.memory_space<vmem>>, %arg3: memref<16x32xf32, #tpu.memory_space<vmem>>, %arg4: memref<16x32xf32, #tpu.memory_space<vmem>>, %arg5: memref<16x3xf32, #tpu.memory_space<vmem>>, %arg6: memref<32x640xf32, #tpu.memory_space<vmem>>, %arg7: memref<1x640xf32, #tpu.memory_space<vmem>>, %arg8: memref<32x384xf32, #tpu.memory_space<vmem>>, %arg9: memref<1x384xf32, #tpu.memory_space<vmem>>, %arg10: memref<32x16xf32, #tpu.memory_space<vmem>>, %arg11: memref<1x16xf32, #tpu.memory_space<vmem>>, %arg12: memref<1x32xf32, #tpu.memory_space<vmem>>, %arg13: memref<16x32xf32, #tpu.memory_space<vmem>>) attributes {dimension_semantics = [], scalar_prefetch = 0 : i64, scratch_operands = 0 : i64, tpu.core_type = #tpu.core_type<tc>} {
    %c0 = arith.constant 0 : index
    %c0_0 = arith.constant 0 : index
    %0 = vector.load %arg1[%c0, %c0_0] : memref<16x32xf32, #tpu.memory_space<vmem>>, vector<16x32xf32>
    %c0_1 = arith.constant 0 : index
    %c0_2 = arith.constant 0 : index
    %1 = vector.load %arg4[%c0_1, %c0_2] : memref<16x32xf32, #tpu.memory_space<vmem>>, vector<16x32xf32>
    %c0_3 = arith.constant 0 : index
    %c0_4 = arith.constant 0 : index
    %2 = vector.load %arg5[%c0_3, %c0_4] : memref<16x3xf32, #tpu.memory_space<vmem>>, vector<16x3xf32>
    %c0_5 = arith.constant 0 : index
    %c0_6 = arith.constant 0 : index
    %3 = memref.load %arg0[%c0_5, %c0_6] : memref<1x1xf32, #tpu.memory_space<smem>>
    %4 = vector.extract_strided_slice %2 {offsets = [0, 0], sizes = [16, 1], strides = [1, 1]} : vector<16x3xf32> to vector<16x1xf32>
    %cst = arith.constant 0.000000e+00 : f32
    %5 = vector.broadcast %cst : f32 to vector<16x1xf32>
    %6 = arith.cmpf ogt, %4, %5 : vector<16x1xf32>
    %7 = arith.extui %6 : vector<16x1xi1> to vector<16x1xi32>
    %8 = arith.sitofp %7 : vector<16x1xi32> to vector<16x1xf32>
    %9 = vector.extract_strided_slice %2 {offsets = [0, 1], sizes = [16, 1], strides = [1, 1]} : vector<16x3xf32> to vector<16x1xf32>
    %cst_7 = arith.constant 0.000000e+00 : f32
    %10 = vector.broadcast %cst_7 : f32 to vector<16x1xf32>
    %11 = arith.cmpf ogt, %9, %10 : vector<16x1xf32>
    %12 = arith.extui %11 : vector<16x1xi1> to vector<16x1xi32>
    %13 = arith.sitofp %12 : vector<16x1xi32> to vector<16x1xf32>
    %14 = vector.broadcast %3 : f32 to vector<16x1xf32>
    %15 = arith.mulf %13, %14 : vector<16x1xf32>
    %16 = vector.extract_strided_slice %2 {offsets = [0, 2], sizes = [16, 1], strides = [1, 1]} : vector<16x3xf32> to vector<16x1xf32>
    %cst_8 = arith.constant 0.000000e+00 : f32
    %17 = vector.broadcast %cst_8 : f32 to vector<16x1xf32>
    %18 = arith.cmpf ogt, %16, %17 : vector<16x1xf32>
    %19 = arith.extui %18 : vector<16x1xi1> to vector<16x1xi32>
    %20 = arith.sitofp %19 : vector<16x1xi32> to vector<16x1xf32>
    %21 = vector.broadcast %3 : f32 to vector<16x1xf32>
    %22 = arith.mulf %20, %21 : vector<16x1xf32>
    %23 = arith.maximumf %15, %22 : vector<16x1xf32>
    %24 = tpu.iota {dimensions = array<i32: 0>} : vector<16x16xi32>
    %25 = tpu.iota {dimensions = array<i32: 1>} : vector<16x16xi32>
    %26 = arith.cmpi eq, %24, %25 : vector<16x16xi32>
    %cst_9 = arith.constant 0.000000e+00 : f32
    %27 = vector.shape_cast %23 : vector<16x1xf32> to vector<16x1xf32>
    %28 = vector.broadcast %27 : vector<16x1xf32> to vector<16x16xf32>
    %29 = vector.broadcast %cst_9 : f32 to vector<16x16xf32>
    %30 = arith.select %26, %28, %29 : vector<16x16xi1>, vector<16x16xf32>
    %cst_10 = arith.constant dense<0.000000e+00> : vector<16xf32>
    %31 = vector.multi_reduction <add>, %30, %cst_10 [0] : vector<16x16xf32> to vector<16xf32>
    %32 = vector.shape_cast %31 : vector<16xf32> to vector<1x16xf32>
    %c0_11 = arith.constant 0 : index
    %c0_12 = arith.constant 0 : index
    %33 = vector.load %arg6[%c0_11, %c0_12] : memref<32x640xf32, #tpu.memory_space<vmem>>, vector<32x640xf32>
    %cst_13 = arith.constant dense<0.000000e+00> : vector<16x640xf32>
    %34 = tpu.matmul %0, %33, %cst_13 {dimension_numbers = #tpu.dot_dimension_numbers<[1], [0], [0], [1], [0, 0, 1, 1], [], []>} : vector<16x32xf32>, vector<32x640xf32>, vector<16x640xf32> -> vector<16x640xf32>
    %c0_14 = arith.constant 0 : index
    %c0_15 = arith.constant 0 : index
    %35 = vector.load %arg7[%c0_14, %c0_15] : memref<1x640xf32, #tpu.memory_space<vmem>>, vector<1x640xf32>
    %36 = vector.broadcast %35 : vector<1x640xf32> to vector<16x640xf32>
    %37 = arith.addf %34, %36 : vector<16x640xf32>
    %c0_16 = arith.constant 0 : index
    %c0_17 = arith.constant 0 : index
    %38 = vector.load %arg8[%c0_16, %c0_17] : memref<32x384xf32, #tpu.memory_space<vmem>>, vector<32x384xf32>
    %c0_18 = arith.constant 0 : index
    %c0_19 = arith.constant 0 : index
    %39 = vector.load %arg9[%c0_18, %c0_19] : memref<1x384xf32, #tpu.memory_space<vmem>>, vector<1x384xf32>
    %cst_20 = arith.constant dense<0.000000e+00> : vector<16x384xf32>
    %40 = tpu.matmul %1, %38, %cst_20 {dimension_numbers = #tpu.dot_dimension_numbers<[1], [0], [0], [1], [0, 0, 1, 1], [], []>} : vector<16x32xf32>, vector<32x384xf32>, vector<16x384xf32> -> vector<16x384xf32>
    %41 = vector.broadcast %39 : vector<1x384xf32> to vector<16x384xf32>
    %42 = arith.addf %40, %41 : vector<16x384xf32>
    %43 = vector.extract_strided_slice %37 {offsets = [0, 0], sizes = [16, 32], strides = [1, 1]} : vector<16x640xf32> to vector<16x32xf32>
    %44 = vector.extract_strided_slice %42 {offsets = [0, 0], sizes = [16, 32], strides = [1, 1]} : vector<16x384xf32> to vector<16x32xf32>
    %45 = arith.addf %43, %44 : vector<16x32xf32>
    %46 = arith.negf %45 : vector<16x32xf32>
    %47 = math.exp %46 : vector<16x32xf32>
    %cst_21 = arith.constant 1.000000e+00 : f32
    %48 = vector.broadcast %cst_21 : f32 to vector<16x32xf32>
    %49 = arith.addf %48, %47 : vector<16x32xf32>
    %50 = arith.divf %48, %49 : vector<16x32xf32>
    %51 = vector.extract_strided_slice %37 {offsets = [0, 128], sizes = [16, 32], strides = [1, 1]} : vector<16x640xf32> to vector<16x32xf32>
    %52 = vector.extract_strided_slice %42 {offsets = [0, 128], sizes = [16, 32], strides = [1, 1]} : vector<16x384xf32> to vector<16x32xf32>
    %53 = arith.addf %51, %52 : vector<16x32xf32>
    %54 = arith.negf %53 : vector<16x32xf32>
    %55 = math.exp %54 : vector<16x32xf32>
    %cst_22 = arith.constant 1.000000e+00 : f32
    %56 = vector.broadcast %cst_22 : f32 to vector<16x32xf32>
    %57 = arith.addf %56, %55 : vector<16x32xf32>
    %58 = arith.divf %56, %57 : vector<16x32xf32>
    %59 = vector.extract_strided_slice %37 {offsets = [0, 256], sizes = [16, 32], strides = [1, 1]} : vector<16x640xf32> to vector<16x32xf32>
    %60 = vector.extract_strided_slice %42 {offsets = [0, 256], sizes = [16, 32], strides = [1, 1]} : vector<16x384xf32> to vector<16x32xf32>
    %61 = arith.mulf %50, %60 : vector<16x32xf32>
    %62 = arith.addf %59, %61 : vector<16x32xf32>
    %63 = math.tanh %62 : vector<16x32xf32>
    %cst_23 = arith.constant 1.000000e+00 : f32
    %64 = vector.broadcast %cst_23 : f32 to vector<16x32xf32>
    %65 = arith.subf %64, %58 : vector<16x32xf32>
    %66 = arith.mulf %65, %63 : vector<16x32xf32>
    %67 = arith.mulf %58, %1 : vector<16x32xf32>
    %68 = arith.addf %66, %67 : vector<16x32xf32>
    %69 = vector.extract_strided_slice %37 {offsets = [0, 384], sizes = [16, 16], strides = [1, 1]} : vector<16x640xf32> to vector<16x16xf32>
    %70 = vector.extract_strided_slice %37 {offsets = [0, 512], sizes = [16, 32], strides = [1, 1]} : vector<16x640xf32> to vector<16x32xf32>
    %c0_24 = arith.constant 0 : index
    %c0_25 = arith.constant 0 : index
    %71 = vector.load %arg2[%c0_24, %c0_25] : memref<16x32xf32, #tpu.memory_space<vmem>>, vector<16x32xf32>
    %72 = vector.broadcast %15 : vector<16x1xf32> to vector<16x32xf32>
    %73 = arith.mulf %72, %71 : vector<16x32xf32>
    %c0_26 = arith.constant 0 : index
    %c0_27 = arith.constant 0 : index
    %74 = vector.load %arg3[%c0_26, %c0_27] : memref<16x32xf32, #tpu.memory_space<vmem>>, vector<16x32xf32>
    %75 = vector.broadcast %22 : vector<16x1xf32> to vector<16x32xf32>
    %76 = arith.mulf %75, %74 : vector<16x32xf32>
    %77 = arith.addf %73, %76 : vector<16x32xf32>
    %c0_28 = arith.constant 0 : index
    %c0_29 = arith.constant 0 : index
    %78 = vector.load %arg10[%c0_28, %c0_29] : memref<32x16xf32, #tpu.memory_space<vmem>>, vector<32x16xf32>
    %cst_30 = arith.constant dense<0.000000e+00> : vector<16x16xf32>
    %79 = tpu.matmul %77, %78, %cst_30 {dimension_numbers = #tpu.dot_dimension_numbers<[1], [0], [0], [1], [0, 0, 1, 1], [], []>} : vector<16x32xf32>, vector<32x16xf32>, vector<16x16xf32> -> vector<16x16xf32>
    %c0_31 = arith.constant 0 : index
    %c0_32 = arith.constant 0 : index
    %80 = vector.load %arg11[%c0_31, %c0_32] : memref<1x16xf32, #tpu.memory_space<vmem>>, vector<1x16xf32>
    %81 = vector.broadcast %80 : vector<1x16xf32> to vector<16x16xf32>
    %82 = arith.addf %79, %81 : vector<16x16xf32>
    %cst_33 = arith.constant dense<0.000000e+00> : vector<16x16xf32>
    %83 = tpu.matmul %82, %69, %cst_33 {dimension_numbers = #tpu.dot_dimension_numbers<[1], [1], [0], [0], [0, 0, 1, 0], [], []>} : vector<16x16xf32>, vector<16x16xf32>, vector<16x16xf32> -> vector<16x16xf32>
    %cst_34 = arith.constant 2.500000e-01 : f32
    %84 = vector.broadcast %cst_34 : f32 to vector<16x16xf32>
    %85 = arith.mulf %83, %84 : vector<16x16xf32>
    %cst_35 = arith.constant 0.000000e+00 : f32
    %86 = vector.broadcast %cst_35 : f32 to vector<1x16xf32>
    %87 = arith.cmpf ogt, %32, %86 : vector<1x16xf32>
    %cst_36 = arith.constant -1.000000e+30 : f32
    %88 = vector.shape_cast %87 : vector<1x16xi1> to vector<1x16xi1>
    %89 = vector.broadcast %88 : vector<1x16xi1> to vector<16x16xi1>
    %90 = vector.broadcast %cst_36 : f32 to vector<16x16xf32>
    %91 = arith.select %89, %85, %90 : vector<16x16xi1>, vector<16x16xf32>
    %cst_37 = arith.constant dense<0xFF800000> : vector<16xf32>
    %92 = vector.multi_reduction <maximumf>, %91, %cst_37 [1] : vector<16x16xf32> to vector<16xf32>
    %93 = vector.shape_cast %92 : vector<16xf32> to vector<16x1xf32>
    %94 = vector.broadcast %93 : vector<16x1xf32> to vector<16x16xf32>
    %95 = arith.subf %91, %94 : vector<16x16xf32>
    %96 = math.exp %95 : vector<16x16xf32>
    %cst_38 = arith.constant dense<0.000000e+00> : vector<16xf32>
    %97 = vector.multi_reduction <add>, %96, %cst_38 [1] : vector<16x16xf32> to vector<16xf32>
    %98 = vector.shape_cast %97 : vector<16xf32> to vector<16x1xf32>
    %cst_39 = arith.constant 0.000000e+00 : f32
    %99 = vector.broadcast %cst_39 : f32 to vector<16x1xf32>
    %100 = arith.cmpf ogt, %98, %99 : vector<16x1xf32>
    %cst_40 = arith.constant 1.000000e+00 : f32
    %101 = vector.broadcast %cst_40 : f32 to vector<16x1xf32>
    %102 = arith.select %100, %98, %101 : vector<16x1xi1>, vector<16x1xf32>
    %103 = tpu.reciprocal %102 {approx = true} : vector<16x1xf32> -> vector<16x1xf32>
    %104 = vector.broadcast %103 : vector<16x1xf32> to vector<16x16xf32>
    %105 = arith.mulf %96, %104 : vector<16x16xf32>
    %cst_41 = arith.constant dense<0.000000e+00> : vector<16x32xf32>
    %106 = tpu.matmul %105, %70, %cst_41 {dimension_numbers = #tpu.dot_dimension_numbers<[1], [0], [0], [1], [0, 0, 1, 1], [], []>} : vector<16x16xf32>, vector<16x32xf32>, vector<16x32xf32> -> vector<16x32xf32>
    %107 = math.tanh %106 : vector<16x32xf32>
    %cst_42 = arith.constant 0.000000e+00 : f32
    %108 = vector.broadcast %cst_42 : f32 to vector<16x1xf32>
    %109 = arith.cmpf ogt, %23, %108 : vector<16x1xf32>
    %cst_43 = arith.constant 0.000000e+00 : f32
    %110 = vector.broadcast %cst_43 : f32 to vector<16x1xf32>
    %111 = arith.cmpf ogt, %8, %110 : vector<16x1xf32>
    %cst_44 = arith.constant 0.000000e+00 : f32
    %112 = vector.shape_cast %111 : vector<16x1xi1> to vector<16x1xi1>
    %113 = vector.broadcast %112 : vector<16x1xi1> to vector<16x32xi1>
    %114 = vector.broadcast %cst_44 : f32 to vector<16x32xf32>
    %115 = arith.select %113, %68, %114 : vector<16x32xi1>, vector<16x32xf32>
    %116 = vector.shape_cast %109 : vector<16x1xi1> to vector<16x1xi1>
    %117 = vector.broadcast %116 : vector<16x1xi1> to vector<16x32xi1>
    %118 = arith.select %117, %107, %115 : vector<16x32xi1>, vector<16x32xf32>
    %c0_45 = arith.constant 0 : index
    %c0_46 = arith.constant 0 : index
    %119 = vector.load %arg13[%c0_45, %c0_46] : memref<16x32xf32, #tpu.memory_space<vmem>>, vector<16x32xf32>
    tpu.vector_store %arg13[%c0_45, %c0_46], %118 {strides = array<i32>} : memref<16x32xf32, #tpu.memory_space<vmem>>, vector<16x32xf32>,
    %cst_47 = arith.constant 0.000000e+00 : f32
    %120 = vector.broadcast %cst_47 : f32 to vector<16x1xf32>
    %121 = arith.cmpf ogt, %8, %120 : vector<16x1xf32>
    %cst_48 = arith.constant -1.000000e+30 : f32
    %122 = vector.shape_cast %121 : vector<16x1xi1> to vector<16x1xi1>
    %123 = vector.broadcast %122 : vector<16x1xi1> to vector<16x32xi1>
    %124 = vector.broadcast %cst_48 : f32 to vector<16x32xf32>
    %125 = arith.select %123, %68, %124 : vector<16x32xi1>, vector<16x32xf32>
    %cst_49 = arith.constant dense<0xFF800000> : vector<32xf32>
    %126 = vector.multi_reduction <maximumf>, %125, %cst_49 [0] : vector<16x32xf32> to vector<32xf32>
    %127 = vector.shape_cast %126 : vector<32xf32> to vector<1x32xf32>
    %cst_50 = arith.constant 0.000000e+00 : f32
    %128 = vector.broadcast %cst_50 : f32 to vector<16x1xf32>
    %129 = arith.cmpf ogt, %23, %128 : vector<16x1xf32>
    %cst_51 = arith.constant -1.000000e+30 : f32
    %130 = vector.shape_cast %129 : vector<16x1xi1> to vector<16x1xi1>
    %131 = vector.broadcast %130 : vector<16x1xi1> to vector<16x32xi1>
    %132 = vector.broadcast %cst_51 : f32 to vector<16x32xf32>
    %133 = arith.select %131, %107, %132 : vector<16x32xi1>, vector<16x32xf32>
    %cst_52 = arith.constant dense<0xFF800000> : vector<32xf32>
    %134 = vector.multi_reduction <maximumf>, %133, %cst_52 [0] : vector<16x32xf32> to vector<32xf32>
    %135 = vector.shape_cast %134 : vector<32xf32> to vector<1x32xf32>
    %136 = arith.maximumf %127, %135 : vector<1x32xf32>
    %137 = vector.shape_cast %8 : vector<16x1xf32> to vector<1x16x1xf32>
    %cst_53 = arith.constant dense<0.000000e+00> : vector<1xf32>
    %138 = vector.multi_reduction <add>, %137, %cst_53 [1, 2] : vector<1x16x1xf32> to vector<1xf32>
    %139 = vector.shape_cast %138 : vector<1xf32> to vector<1x1x1xf32>
    %140 = vector.extract %139[0, 0, 0] : f32 from vector<1x1x1xf32>
    %141 = vector.shape_cast %23 : vector<16x1xf32> to vector<1x16x1xf32>
    %cst_54 = arith.constant dense<0.000000e+00> : vector<1xf32>
    %142 = vector.multi_reduction <add>, %141, %cst_54 [1, 2] : vector<1x16x1xf32> to vector<1xf32>
    %143 = vector.shape_cast %142 : vector<1xf32> to vector<1x1x1xf32>
    %144 = vector.extract %143[0, 0, 0] : f32 from vector<1x1x1xf32>
    %145 = arith.addf %140, %144 : f32
    %cst_55 = arith.constant 0.000000e+00 : f32
    %146 = arith.cmpf ogt, %145, %cst_55 : f32
    %cst_56 = arith.constant 0.000000e+00 : f32
    %147 = vector.broadcast %cst_56 : f32 to vector<1x32xf32>
    %148 = arith.select %146, %136, %147 : vector<1x32xf32>
    %c0_57 = arith.constant 0 : index
    %c0_58 = arith.constant 0 : index
    %149 = vector.load %arg12[%c0_57, %c0_58] : memref<1x32xf32, #tpu.memory_space<vmem>>, vector<1x32xf32>
    tpu.vector_store %arg12[%c0_57, %c0_58], %148 {strides = array<i32>} : memref<1x32xf32, #tpu.memory_space<vmem>>, vector<1x32xf32>,
    return
  }
}

</mosaic_0001>

<llo_original>
// kernel: tpu_custom_call.1
$region0: #{tpu_custom_call.1}
  #allocation0 [shape = 'u32[]', space=smem, size = 0x4, offset = 0x4, fixed_abs, tag = 'smem constant byte address 0x4 - core index']
  #allocation1 [shape = 'u32[144,128]{1,0:T(1,128)}', space=vmem, size = 0x12000, scoped, tag = 'internal scratch']
  #allocation2 [shape = 'f32[1,1]{1,0:T(1,128)S(6)}', space=smem, size = 0x200, scoped, tag = 'scoped memory for tpu_custom_call.1']
  %s0 = inlined_call_operand.<no memory space> [shape: f32[1,1], index: 0, kind: input, shape index: {}]
  %s1 = inlined_call_operand.hbm [shape: f32[16,32], index: 1, kind: input, shape index: {}]
  %s2 = inlined_call_operand.hbm [shape: f32[16,32], index: 2, kind: input, shape index: {}]
  %s3 = inlined_call_operand.hbm [shape: f32[16,32], index: 3, kind: input, shape index: {}]
  %s4 = inlined_call_operand.hbm [shape: f32[16,32], index: 4, kind: input, shape index: {}]
  %s5 = inlined_call_operand.vmem [shape: f32[16,3], index: 5, kind: input, shape index: {}]
  %s6 = inlined_call_operand.hbm [shape: f32[32,640], index: 6, kind: input, shape index: {}]
  %s7 = inlined_call_operand.hbm [shape: f32[1,640], index: 7, kind: input, shape index: {}]
  %s8 = inlined_call_operand.vmem [shape: f32[32,384], index: 8, kind: input, shape index: {}]
  %s9 = inlined_call_operand.vmem [shape: f32[1,384], index: 9, kind: input, shape index: {}]
  %s10 = inlined_call_operand.vmem [shape: f32[32,16], index: 10, kind: input, shape index: {}]
  %s11 = inlined_call_operand.vmem [shape: f32[1,16], index: 11, kind: input, shape index: {}]
  %s12 = inlined_call_operand.hbm [shape: f32[1,32], index: 12, kind: output, shape index: {0}]
  %s13 = inlined_call_operand.hbm [shape: f32[16,32], index: 13, kind: output, shape index: {1}]
  %14 = xla_tuple %s12, %s13
  %s15 = sld [smem:[#allocation0]]
  $region90: #{tpu_custom_call.1} parent=0
    _
  %s17 = ssub.s32 1, %s15
  %s18 = scalar_select 0, %s17, %s15
  %19 = sst [smem:[#allocation2]] %s0
  $region1: #{tpu_custom_call.1} parent=0
    #allocation3 [shape = 'u8[8192]{0}', space=vmem, size = 0x2000, scoped, tag = 'input window, operand 1, single buffered']
    #allocation4 [shape = 's32[1]{0}', space=sflag, size = 0x4, scoped, tag = 'scoped memory for tpu_custom_call.1']
    #allocation5 [shape = 's32[1]{0}', space=sflag, size = 0x4, scoped, tag = 'scoped memory for tpu_custom_call.1']
    #allocation6 [shape = 'u8[8192]{0}', space=vmem, size = 0x2000, scoped, tag = 'input window, operand 2, single buffered']
    #allocation7 [shape = 's32[1]{0}', space=sflag, size = 0x4, scoped, tag = 'scoped memory for tpu_custom_call.1']
    #allocation8 [shape = 'u8[8192]{0}', space=vmem, size = 0x2000, scoped, tag = 'input window, operand 3, single buffered']
    #allocation9 [shape = 'u8[8192]{0}', space=vmem, size = 0x2000, scoped, tag = 'input window, operand 4, single buffered']
    #allocation10 [shape = 's32[1]{0}', space=sflag, size = 0x4, scoped, tag = 'scoped memory for tpu_custom_call.1']
    #allocation11 [shape = 'u8[81920]{0}', space=vmem, size = 0x14000, scoped, tag = 'input window, operand 6, single buffered']
    #allocation12 [shape = 'u8[2560]{0}', space=vmem, size = 0xc00, scoped, tag = 'input window, operand 7, single buffered']
    #allocation13 [shape = 's32[1]{0}', space=sflag, size = 0x4, scoped, tag = 'scoped memory for tpu_custom_call.1']
    #allocation14 [shape = 'u8[512]{0}', space=vmem, size = 0x400, scoped, tag = 'output window, operand 0, single buffered']
    #allocation15 [shape = 'u8[8192]{0}', space=vmem, size = 0x2000, scoped, tag = 'output window, operand 1, single buffered']
    #allocation16 [shape = 's32[1]{0}', space=sflag, size = 0x4, scoped, tag = 'scoped memory for tpu_custom_call.1']
    %20 = vsyncpa [#allocation4], 0
    %21 = vsyncpa [#allocation7], 0
    %22 = vsyncpa [#allocation10], 0
    %23 = vsyncpa [#allocation13], 0
    %24 = vsyncpa [#allocation5], 0
    %25 = vsyncpa [#allocation16], 0
    // Predicated region
    $region2: #{tpu_custom_call.1} parent=1 // pred_check
      _
    $region3: #{tpu_custom_call.1} parent=1 // pred_check_branch
      %27 = sbr.rel (0) target = $region5
    $region4: #{tpu_custom_call.1} parent=1 // pred_region
      _
    $region5: #{tpu_custom_call.1} parent=1 // pred_fallthru
      _
    // Predicated region
    $region6: #{tpu_custom_call.1} parent=1 // pred_check
      _
    $region7: #{tpu_custom_call.1} parent=1 // pred_check_branch
      %29 = sbr.rel (0) target = $region9
    $region8: #{tpu_custom_call.1} parent=1 // pred_region
      %s31 = ssub.s32 256, 256
      %32 = vsyncadd [#allocation4], %s31
      %s33 = sshll.u32 [#allocation3], 4
      %s34 = int_to_ptr.vmem [resolvable:$true] %s33
      %39 = dma.hbm_to_vmem [thread:$0]  %s1, 256, %s34, [#allocation4], 128, 128, 8
    $region9: #{tpu_custom_call.1} parent=1 // pred_fallthru
      _
    // Predicated region
    $region10: #{tpu_custom_call.1} parent=1 // pred_check
      _
    $region11: #{tpu_custom_call.1} parent=1 // pred_check_branch
      %41 = sbr.rel (0) target = $region13
    $region12: #{tpu_custom_call.1} parent=1 // pred_region
      %s43 = ssub.s32 256, 256
      %44 = vsyncadd [#allocation7], %s43
      %s45 = sshll.u32 [#allocation6], 4
      %s46 = int_to_ptr.vmem [resolvable:$true] %s45
      %51 = dma.hbm_to_vmem [thread:$0]  %s2, 256, %s46, [#allocation7], 128, 128, 8
    $region13: #{tpu_custom_call.1} parent=1 // pred_fallthru
      _
    // Predicated region
    $region14: #{tpu_custom_call.1} parent=1 // pred_check
      _
    $region15: #{tpu_custom_call.1} parent=1 // pred_check_branch
      %53 = sbr.rel (0) target = $region17
    $region16: #{tpu_custom_call.1} parent=1 // pred_region
      %s55 = ssub.s32 256, 256
      %56 = vsyncadd [#allocation7], %s55
      %s57 = sshll.u32 [#allocation8], 4
      %s58 = int_to_ptr.vmem [resolvable:$true] %s57
      %63 = dma.hbm_to_vmem [thread:$0]  %s3, 256, %s58, [#allocation7], 128, 128, 8
    $region17: #{tpu_custom_call.1} parent=1 // pred_fallthru
      _
    // Predicated region
    $region18: #{tpu_custom_call.1} parent=1 // pred_check
      _
    $region19: #{tpu_custom_call.1} parent=1 // pred_check_branch
      %65 = sbr.rel (0) target = $region21
    $region20: #{tpu_custom_call.1} parent=1 // pred_region
      %s67 = ssub.s32 256, 256
      %68 = vsyncadd [#allocation10], %s67
      %s69 = sshll.u32 [#allocation9], 4
      %s70 = int_to_ptr.vmem [resolvable:$true] %s69
      %75 = dma.hbm_to_vmem [thread:$0]  %s4, 256, %s70, [#allocation10], 128, 128, 8
    $region21: #{tpu_custom_call.1} parent=1 // pred_fallthru
      _
    // Predicated region
    $region22: #{tpu_custom_call.1} parent=1 // pred_check
      _
    $region23: #{tpu_custom_call.1} parent=1 // pred_check_branch
      %77 = sbr.rel (0) target = $region25
    $region24: #{tpu_custom_call.1} parent=1 // pred_region
      _
    $region25: #{tpu_custom_call.1} parent=1 // pred_fallthru
      _
    // Predicated region
    $region26: #{tpu_custom_call.1} parent=1 // pred_check
      _
    $region27: #{tpu_custom_call.1} parent=1 // pred_check_branch
      %79 = sbr.rel (0) target = $region29
    $region28: #{tpu_custom_call.1} parent=1 // pred_region
      %s81 = ssub.s32 2560, 2560
      %82 = vsyncadd [#allocation10], %s81
      %s83 = sshll.u32 [#allocation11], 4
      %s84 = int_to_ptr.vmem [resolvable:$true] %s83
      %89 = dma.hbm_to_vmem [thread:$0]  %s6, 2560, %s84, [#allocation10], 640, 640, 40
    $region29: #{tpu_custom_call.1} parent=1 // pred_fallthru
      _
    // Predicated region
    $region30: #{tpu_custom_call.1} parent=1 // pred_check
      _
    $region31: #{tpu_custom_call.1} parent=1 // pred_check_branch
      %91 = sbr.rel (0) target = $region33
    $region32: #{tpu_custom_call.1} parent=1 // pred_region
      %s93 = ssub.s32 80, 80
      %94 = vsyncadd [#allocation13], %s93
      %s96 = sshll.u32 [#allocation12], 4
      %s97 = int_to_ptr.vmem [resolvable:$true] %s96
      %99 = dma.hbm_to_vmem [thread:$0]  %s7, 80, %s97, [#allocation13]
    $region33: #{tpu_custom_call.1} parent=1 // pred_fallthru
      _
    // Predicated region
    $region34: #{tpu_custom_call.1} parent=1 // pred_check
      _
    $region35: #{tpu_custom_call.1} parent=1 // pred_check_branch
      %101 = sbr.rel (0) target = $region37
    $region36: #{tpu_custom_call.1} parent=1 // pred_region
      _
    $region37: #{tpu_custom_call.1} parent=1 // pred_fallthru
      _
    // Predicated region
    $region38: #{tpu_custom_call.1} parent=1 // pred_check
      _
    $region39: #{tpu_custom_call.1} parent=1 // pred_check_branch
      %103 = sbr.rel (0) target = $region41
    $region40: #{tpu_custom_call.1} parent=1 // pred_region
      _
    $region41: #{tpu_custom_call.1} parent=1 // pred_fallthru
      _
    // Predicated region
    $region42: #{tpu_custom_call.1} parent=1 // pred_check
      _
    $region43: #{tpu_custom_call.1} parent=1 // pred_check_branch
      %105 = sbr.rel (0) target = $region45
    $region44: #{tpu_custom_call.1} parent=1 // pred_region
      _
    $region45: #{tpu_custom_call.1} parent=1 // pred_fallthru
      _
    // Predicated region
    $region46: #{tpu_custom_call.1} parent=1 // pred_check
      _
    $region47: #{tpu_custom_call.1} parent=1 // pred_check_branch
      %107 = sbr.rel (0) target = $region49
    $region48: #{tpu_custom_call.1} parent=1 // pred_region
      _
    $region49: #{tpu_custom_call.1} parent=1 // pred_fallthru
      _
    // Predicated region
    $region50: #{tpu_custom_call.1} parent=1 // pred_check
      _
    $region51: #{tpu_custom_call.1} parent=1 // pred_check_branch
      %109 = sbr.rel (0) target = $region53
    $region52: #{tpu_custom_call.1} parent=1 // pred_region
      %110 = dma.done [#allocation4], 256
    $region53: #{tpu_custom_call.1} parent=1 // pred_fallthru
      _
    // Predicated region
    $region54: #{tpu_custom_call.1} parent=1 // pred_check
      _
    $region55: #{tpu_custom_call.1} parent=1 // pred_check_branch
      %112 = sbr.rel (0) target = $region57
    $region56: #{tpu_custom_call.1} parent=1 // pred_region
      %113 = dma.done [#allocation7], 256
    $region57: #{tpu_custom_call.1} parent=1 // pred_fallthru
      _
    // Predicated region
    $region58: #{tpu_custom_call.1} parent=1 // pred_check
      _
    $region59: #{tpu_custom_call.1} parent=1 // pred_check_branch
      %115 = sbr.rel (0) target = $region61
    $region60: #{tpu_custom_call.1} parent=1 // pred_region
      %116 = dma.done [#allocation7], 256
    $region61: #{tpu_custom_call.1} parent=1 // pred_fallthru
      _
    // Predicated region
    $region62: #{tpu_custom_call.1} parent=1 // pred_check
      _
    $region63: #{tpu_custom_call.1} parent=1 // pred_check_branch
      %118 = sbr.rel (0) target = $region65
    $region64: #{tpu_custom_call.1} parent=1 // pred_region
      %119 = dma.done [#allocation10], 256
    $region65: #{tpu_custom_call.1} parent=1 // pred_fallthru
      _
    // Predicated region
    $region66: #{tpu_custom_call.1} parent=1 // pred_check
      _
    $region67: #{tpu_custom_call.1} parent=1 // pred_check_branch
      %121 = sbr.rel (0) target = $region69
    $region68: #{tpu_custom_call.1} parent=1 // pred_region
      %122 = dma.done [#allocation10], 2560
    $region69: #{tpu_custom_call.1} parent=1 // pred_fallthru
      _
    // Predicated region
    $region70: #{tpu_custom_call.1} parent=1 // pred_check
      _
    $region71: #{tpu_custom_call.1} parent=1 // pred_check_branch
      %124 = sbr.rel (0) target = $region73
    $region72: #{tpu_custom_call.1} parent=1 // pred_region
      %125 = dma.done [#allocation13], 80
    $region73: #{tpu_custom_call.1} parent=1 // pred_fallthru
      _
    %v126 = vld [vmem:[#allocation3] sm:$0xff]
    %v127 = vld [vmem:[#allocation3 + $0x8] sm:$0xff]
    %v128 = vld [vmem:[#allocation9] sm:$0xff]
    %v129 = vld [vmem:[#allocation9 + $0x8] sm:$0xff]
    %v130 = vld [vmem:[%s5] sm:$0xff]
    %v131 = vld [vmem:[%s5 + $0x8] sm:$0xff]
    %s132 = sld [smem:[#allocation2]]
    %vm133 = vcmp.gt.f32.partialorder %v130, 0.0
    %vm134 = vcmp.gt.f32.partialorder %v131, 0.0
    %v135 = vsel %vm133, 1, 0
    %v136 = vsel %vm134, 1, 0
    %v137 = vcvt.s32.f32 %v135
    %v138 = vcvt.s32.f32 %v136
    %v139 = vstv %s132
    %v140 = vmul.f32 %v137, %v139
    %v141 = vmul.f32 %v138, %v139
    %144 = vrot.lane.b32.xlu0 %v140, 127
    %v145 = vpop.permute.xlu0 %144
    %146 = vrot.lane.b32.xlu0 %v141, 127
    %v147 = vpop.permute.xlu0 %146
    %v150 = vmax.f32 %v140, %v145
    %v151 = vmax.f32 %v141, %v147
    %v152 = vlaneseq
    %v153 = vshrl.u32 %v152, 7
    %v154 = vadd.s32 %v153, 8
    %v155 = vlaneseq
    %v156 = vand.u32 %v155, 127
    %vm157 = vcmp.eq.s32.totalorder %v153, %v156
    %vm158 = vcmp.eq.s32.totalorder %v154, %v156
    %160 = vset.pattern.permute.xlu0 1
    %161 = vperm.xlu0 %160, %v150
    %v162 = vpop.permute.xlu0 %161
    %165 = vset.pattern.permute.xlu0 1
    %166 = vperm.xlu0 %165, %v151
    %v167 = vpop.permute.xlu0 %166
    %v169 = vsel %vm157, %v162, 0.0
    %v170 = vsel %vm158, %v167, 0.0
    %vm171 = vcmask 130048
    %v172 = vsel %vm171, %v169, 0.0
    %v173 = vsel %vm171, %v170, 0.0
    %v174 = vadd.f32 %v172, %v173
    %v175 = vrot.slane %v174, 4
    %v176 = vadd.f32 %v174, %v175
    %v177 = vrot.slane %v176, 2
    %v178 = vadd.f32 %v176, %v177
    %v179 = vrot.slane %v178, 1
    %v180 = vadd.f32 %v178, %v179
    %v181 = vld [vmem:[#allocation11] sm:$0xff]
    %v182 = vld [vmem:[#allocation11 + $0x8] sm:$0xff]
    %v183 = vld [vmem:[#allocation11 + $0x10] sm:$0xff]
    %v184 = vld [vmem:[#allocation11 + $0x18] sm:$0xff]
    %v185 = vld [vmem:[#allocation11 + $0x20] sm:$0xff]
    %v186 = vld [vmem:[#allocation11 + $0x28] sm:$0xff]
    %v187 = vld [vmem:[#allocation11 + $0x30] sm:$0xff]
    %v188 = vld [vmem:[#allocation11 + $0x38] sm:$0xff]
    %v189 = vld [vmem:[#allocation11 + $0x40] sm:$0xff]
    %v190 = vld [vmem:[#allocation11 + $0x48] sm:$0xff]
    %v191 = vld [vmem:[#allocation11 + $0x50] sm:$0xff]
    %v192 = vld [vmem:[#allocation11 + $0x58] sm:$0xff]
    %v193 = vld [vmem:[#allocation11 + $0x60] sm:$0xff]
    %v194 = vld [vmem:[#allocation11 + $0x68] sm:$0xff]
    %v195 = vld [vmem:[#allocation11 + $0x70] sm:$0xff]
    %v196 = vld [vmem:[#allocation11 + $0x78] sm:$0xff]
    %v197 = vld [vmem:[#allocation11 + $0x80] sm:$0xff]
    %v198 = vld [vmem:[#allocation11 + $0x88] sm:$0xff]
    %v199 = vld [vmem:[#allocation11 + $0x90] sm:$0xff]
    %v200 = vld [vmem:[#allocation11 + $0x98] sm:$0xff]
    %v201 = vld [vmem:[#allocation12] sm:$0x1f]
    %v203 = vlaneseq
    %v204 = vshrl.u32 %v203, 7
    %v205 = vsub.s32 0, %v204
    %v206 = vrot.slane %v201, %v205
    %v207 = vlaneseq
    %v208 = vshrl.u32 %v207, 7
    %v209 = vsub.s32 1, %v208
    %v210 = vrot.slane %v201, %v209
    %v211 = vlaneseq
    %v212 = vshrl.u32 %v211, 7
    %v213 = vsub.s32 2, %v212
    %v214 = vrot.slane %v201, %v213
    %v215 = vlaneseq
    %v216 = vshrl.u32 %v215, 7
    %v217 = vsub.s32 3, %v216
    %v218 = vrot.slane %v201, %v217
    %v219 = vlaneseq
    %v220 = vshrl.u32 %v219, 7
    %v221 = vsub.s32 4, %v220
    %v222 = vrot.slane %v201, %v221
    %vm228 = vcmask 261120
    %v230 = vsel %vm228, %v126, 0
    %v233 = vsel %vm228, %v127, 0
    %235 = vmatprep.subr.mxu0 %v182
    %236 = vmatpush1.msra.mxu0 %v181
    %237 = vmatprep.subr.mxu0 %v187
    %238 = vmatpush1.msra.mxu0 %v186
    %239 = vmatprep.subr.mxu0 %v192
    %240 = vmatpush1.msra.mxu0 %v191
    %241 = vmatprep.subr.mxu0 %v197
    %242 = vmatpush1.msra.mxu0 %v196
    %243 = vmatprep.subr.mxu0 0.0
    %244 = vmatpush1.msra.mxu0 0.0
    %245 = vmatprep.subr.mxu0 0.0
    %246 = vmatpush1.msra.mxu0 0.0
    %247 = vmatprep.subr.mxu0 0.0
    %248 = vmatpush1.msra.mxu0 0.0
    %249 = vmatprep.subr.mxu0 0.0
    %250 = vmatpush1.msra.mxu0 0.0
    %251 = vmatprep.subr.mxu0 0.0
    %252 = vmatpush1.msra.mxu0 0.0
    %253 = vmatprep.subr.mxu0 0.0
    %254 = vmatpush1.msra.mxu0 0.0
    %255 = vmatprep.subr.mxu0 0.0
    %256 = vmatpush1.msra.mxu0 0.0
    %257 = vmatprep.subr.mxu0 0.0
    %258 = vmatpush1.msra.mxu0 0.0
    %259 = vmatprep.subr.mxu0 0.0
    %260 = vmatpush1.msra.mxu0 0.0
    %261 = vmatprep.subr.mxu0 0.0
    %262 = vmatpush1.msra.mxu0 0.0
    %263 = vmatprep.subr.mxu0 0.0
    %264 = vmatpush1.msra.mxu0 0.0
    %265 = vmatprep.subr.mxu0 0.0
    %266 = vmatpush1.msra.mxu0 0.0
    %267 = vmatprep.subr.mxu0 0.0
    %268 = vmatpush1.msra.mxu0 0.0
    %269 = vmatprep.subr.mxu0 0.0
    %270 = vmatpush1.msra.mxu0 0.0
    %271 = vmatprep.subr.mxu0 0.0
    %272 = vmatpush1.msra.mxu0 0.0
    %273 = vmatprep.subr.mxu0 0.0
    %274 = vmatpush1.msra.mxu0 0.0
    %275 = vmatprep.subr.mxu0 0.0
    %276 = vmatpush1.msra.mxu0 0.0
    %277 = vmatprep.subr.mxu0 0.0
    %278 = vmatpush1.msra.mxu0 0.0
    %279 = vmatprep.subr.mxu0 0.0
    %280 = vmatpush1.msra.mxu0 0.0
    %281 = vmatprep.subr.mxu0 0.0
    %282 = vmatpush1.msra.mxu0 0.0
    %283 = vmatprep.subr.mxu0 0.0
    %284 = vmatpush1.msra.mxu0 0.0
    %285 = vmatprep.subr.mxu0 0.0
    %286 = vmatpush1.msra.mxu0 0.0
    %287 = vmatprep.subr.mxu0 0.0
    %288 = vmatpush1.msra.mxu0 0.0
    %289 = vmatprep.subr.mxu0 0.0
    %290 = vmatpush1.msra.mxu0 0.0
    %291 = vmatprep.subr.mxu0 0.0
    %292 = vmatpush1.msra.mxu0 0.0
    %293 = vmatprep.subr.mxu0 0.0
    %294 = vmatpush1.msra.mxu0 0.0
    %295 = vmatprep.subr.mxu0 0.0
    %296 = vmatpush1.msra.mxu0 0.0
    %297 = vmatprep.subr.mxu0 0.0
    %298 = vmatpush1.msra.mxu0 0.0
    %299 = vmatprep.mubr.f32.mxu0 0.0
    %300 = vmatmul.mubr.f32.gmra.mrb[0].mxu0 %v230
    %v301 = vpop.f32.mrb[0].mxu0
    %v302 = vadd.f32 %v206, %v301
    %v303 = vpop.f32.mrb[0].mxu0
    %v304 = vadd.f32 %v210, %v303
    %305 = vmatprep.mubr.f32.mxu0 0.0
    %306 = vmatmul.mubr.f32.gmra.mrb[0].mxu0 %v233
    %v307 = vpop.f32.mrb[0].mxu0
    %v308 = vadd.f32 %v206, %v307
    %v309 = vpop.f32.mrb[0].mxu0
    %v310 = vadd.f32 %v210, %v309
    %311 = vdwg.mxu0
    %312 = vmatprep.subr.mxu0 %v184
    %313 = vmatpush1.msra.mxu0 %v183
    %314 = vmatprep.subr.mxu0 %v189
    %315 = vmatpush1.msra.mxu0 %v188
    %316 = vmatprep.subr.mxu0 %v194
    %317 = vmatpush1.msra.mxu0 %v193
    %318 = vmatprep.subr.mxu0 %v199
    %319 = vmatpush1.msra.mxu0 %v198
    %320 = vmatprep.subr.mxu0 0.0
    %321 = vmatpush1.msra.mxu0 0.0
    %322 = vmatprep.subr.mxu0 0.0
    %323 = vmatpush1.msra.mxu0 0.0
    %324 = vmatprep.subr.mxu0 0.0
    %325 = vmatpush1.msra.mxu0 0.0
    %326 = vmatprep.subr.mxu0 0.0
    %327 = vmatpush1.msra.mxu0 0.0
    %328 = vmatprep.subr.mxu0 0.0
    %329 = vmatpush1.msra.mxu0 0.0
    %330 = vmatprep.subr.mxu0 0.0
    %331 = vmatpush1.msra.mxu0 0.0
    %332 = vmatprep.subr.mxu0 0.0
    %333 = vmatpush1.msra.mxu0 0.0
    %334 = vmatprep.subr.mxu0 0.0
    %335 = vmatpush1.msra.mxu0 0.0
    %336 = vmatprep.subr.mxu0 0.0
    %337 = vmatpush1.msra.mxu0 0.0
    %338 = vmatprep.subr.mxu0 0.0
    %339 = vmatpush1.msra.mxu0 0.0
    %340 = vmatprep.subr.mxu0 0.0
    %341 = vmatpush1.msra.mxu0 0.0
    %342 = vmatprep.subr.mxu0 0.0
    %343 = vmatpush1.msra.mxu0 0.0
    %344 = vmatprep.subr.mxu0 0.0
    %345 = vmatpush1.msra.mxu0 0.0
    %346 = vmatprep.subr.mxu0 0.0
    %347 = vmatpush1.msra.mxu0 0.0
    %348 = vmatprep.subr.mxu0 0.0
    %349 = vmatpush1.msra.mxu0 0.0
    %350 = vmatprep.subr.mxu0 0.0
    %351 = vmatpush1.msra.mxu0 0.0
    %352 = vmatprep.subr.mxu0 0.0
    %353 = vmatpush1.msra.mxu0 0.0
    %354 = vmatprep.subr.mxu0 0.0
    %355 = vmatpush1.msra.mxu0 0.0
    %356 = vmatprep.subr.mxu0 0.0
    %357 = vmatpush1.msra.mxu0 0.0
    %358 = vmatprep.subr.mxu0 0.0
    %359 = vmatpush1.msra.mxu0 0.0
    %360 = vmatprep.subr.mxu0 0.0
    %361 = vmatpush1.msra.mxu0 0.0
    %362 = vmatprep.subr.mxu0 0.0
    %363 = vmatpush1.msra.mxu0 0.0
    %364 = vmatprep.subr.mxu0 0.0
    %365 = vmatpush1.msra.mxu0 0.0
    %366 = vmatprep.subr.mxu0 0.0
    %367 = vmatpush1.msra.mxu0 0.0
    %368 = vmatprep.subr.mxu0 0.0
    %369 = vmatpush1.msra.mxu0 0.0
    %370 = vmatprep.subr.mxu0 0.0
    %371 = vmatpush1.msra.mxu0 0.0
    %372 = vmatprep.subr.mxu0 0.0
    %373 = vmatpush1.msra.mxu0 0.0
    %374 = vmatprep.subr.mxu0 0.0
    %375 = vmatpush1.msra.mxu0 0.0
    %376 = vmatprep.mubr.f32.mxu0 0.0
    %377 = vmatmul.mubr.f32.gmra.mrb[0].mxu0 %v230
    %v378 = vpop.f32.mrb[0].mxu0
    %v379 = vadd.f32 %v214, %v378
    %v380 = vpop.f32.mrb[0].mxu0
    %v381 = vadd.f32 %v218, %v380
    %382 = vmatprep.mubr.f32.mxu0 0.0
    %383 = vmatmul.mubr.f32.gmra.mrb[0].mxu0 %v233
    %v384 = vpop.f32.mrb[0].mxu0
    %v385 = vadd.f32 %v214, %v384
    %v386 = vpop.f32.mrb[0].mxu0
    %v387 = vadd.f32 %v218, %v386
    %388 = vdwg.mxu0
    %389 = vmatprep.subr.mxu0 0.0
    %390 = vmatpush1.msra.mxu0 %v185
    %391 = vmatprep.subr.mxu0 0.0
    %392 = vmatpush1.msra.mxu0 %v190
    %393 = vmatprep.subr.mxu0 0.0
    %394 = vmatpush1.msra.mxu0 %v195
    %395 = vmatprep.subr.mxu0 0.0
    %396 = vmatpush1.msra.mxu0 %v200
    %397 = vmatprep.subr.mxu0 0.0
    %398 = vmatpush1.msra.mxu0 0.0
    %399 = vmatprep.subr.mxu0 0.0
    %400 = vmatpush1.msra.mxu0 0.0
    %401 = vmatprep.subr.mxu0 0.0
    %402 = vmatpush1.msra.mxu0 0.0
    %403 = vmatprep.subr.mxu0 0.0
    %404 = vmatpush1.msra.mxu0 0.0
    %405 = vmatprep.subr.mxu0 0.0
    %406 = vmatpush1.msra.mxu0 0.0
    %407 = vmatprep.subr.mxu0 0.0
    %408 = vmatpush1.msra.mxu0 0.0
    %409 = vmatprep.subr.mxu0 0.0
    %410 = vmatpush1.msra.mxu0 0.0
    %411 = vmatprep.subr.mxu0 0.0
    %412 = vmatpush1.msra.mxu0 0.0
    %413 = vmatprep.subr.mxu0 0.0
    %414 = vmatpush1.msra.mxu0 0.0
    %415 = vmatprep.subr.mxu0 0.0
    %416 = vmatpush1.msra.mxu0 0.0
    %417 = vmatprep.subr.mxu0 0.0
    %418 = vmatpush1.msra.mxu0 0.0
    %419 = vmatprep.subr.mxu0 0.0
    %420 = vmatpush1.msra.mxu0 0.0
    %421 = vmatprep.subr.mxu0 0.0
    %422 = vmatpush1.msra.mxu0 0.0
    %423 = vmatprep.subr.mxu0 0.0
    %424 = vmatpush1.msra.mxu0 0.0
    %425 = vmatprep.subr.mxu0 0.0
    %426 = vmatpush1.msra.mxu0 0.0
    %427 = vmatprep.subr.mxu0 0.0
    %428 = vmatpush1.msra.mxu0 0.0
    %429 = vmatprep.subr.mxu0 0.0
    %430 = vmatpush1.msra.mxu0 0.0
    %431 = vmatprep.subr.mxu0 0.0
    %432 = vmatpush1.msra.mxu0 0.0
    %433 = vmatprep.subr.mxu0 0.0
    %434 = vmatpush1.msra.mxu0 0.0
    %435 = vmatprep.subr.mxu0 0.0
    %436 = vmatpush1.msra.mxu0 0.0
    %437 = vmatprep.subr.mxu0 0.0
    %438 = vmatpush1.msra.mxu0 0.0
    %439 = vmatprep.subr.mxu0 0.0
    %440 = vmatpush1.msra.mxu0 0.0
    %441 = vmatprep.subr.mxu0 0.0
    %442 = vmatpush1.msra.mxu0 0.0
    %443 = vmatprep.subr.mxu0 0.0
    %444 = vmatpush1.msra.mxu0 0.0
    %445 = vmatprep.subr.mxu0 0.0
    %446 = vmatpush1.msra.mxu0 0.0
    %447 = vmatprep.subr.mxu0 0.0
    %448 = vmatpush1.msra.mxu0 0.0
    %449 = vmatprep.subr.mxu0 0.0
    %450 = vmatpush1.msra.mxu0 0.0
    %451 = vmatprep.subr.mxu0 0.0
    %452 = vmatpush1.msra.mxu0 0.0
    %453 = vmatprep.mubr.f32.mxu0 0.0
    %454 = vmatmul.mubr.f32.gmra.mrb[0].mxu0 %v230
    %v455 = vpop.f32.mrb[0].mxu0
    %v456 = vadd.f32 %v222, %v455
    %v457 = vpop.f32.mrb[0].mxu0
    %458 = vmatprep.mubr.f32.mxu0 0.0
    %459 = vmatmul.mubr.f32.gmra.mrb[0].mxu0 %v233
    %v460 = vpop.f32.mrb[0].mxu0
    %v461 = vadd.f32 %v222, %v460
    %v462 = vpop.f32.mrb[0].mxu0
    %463 = vdwg.mxu0
    %v464 = vld [vmem:[%s8] sm:$0xff]
    %v465 = vld [vmem:[%s8 + $0x8] sm:$0xff]
    %v466 = vld [vmem:[%s8 + $0x10] sm:$0xff]
    %v467 = vld [vmem:[%s8 + $0x18] sm:$0xff]
    %v468 = vld [vmem:[%s8 + $0x20] sm:$0xff]
    %v469 = vld [vmem:[%s8 + $0x28] sm:$0xff]
    %v470 = vld [vmem:[%s8 + $0x30] sm:$0xff]
    %v471 = vld [vmem:[%s8 + $0x38] sm:$0xff]
    %v472 = vld [vmem:[%s8 + $0x40] sm:$0xff]
    %v473 = vld [vmem:[%s8 + $0x48] sm:$0xff]
    %v474 = vld [vmem:[%s8 + $0x50] sm:$0xff]
    %v475 = vld [vmem:[%s8 + $0x58] sm:$0xff]
    %v476 = vld [vmem:[%s9] sm:$0x7]
    %v478 = vlaneseq
    %v479 = vshrl.u32 %v478, 7
    %v480 = vsub.s32 0, %v479
    %v481 = vrot.slane %v476, %v480
    %v482 = vlaneseq
    %v483 = vshrl.u32 %v482, 7
    %v484 = vsub.s32 1, %v483
    %v485 = vrot.slane %v476, %v484
    %v486 = vlaneseq
    %v487 = vshrl.u32 %v486, 7
    %v488 = vsub.s32 2, %v487
    %v489 = vrot.slane %v476, %v488
    %v494 = vsel %vm228, %v128, 0
    %v497 = vsel %vm228, %v129, 0
    %499 = vmatprep.subr.mxu0 %v465
    %500 = vmatpush1.msra.mxu0 %v464
    %501 = vmatprep.subr.mxu0 %v468
    %502 = vmatpush1.msra.mxu0 %v467
    %503 = vmatprep.subr.mxu0 %v471
    %504 = vmatpush1.msra.mxu0 %v470
    %505 = vmatprep.subr.mxu0 %v474
    %506 = vmatpush1.msra.mxu0 %v473
    %507 = vmatprep.subr.mxu0 0.0
    %508 = vmatpush1.msra.mxu0 0.0
    %509 = vmatprep.subr.mxu0 0.0
    %510 = vmatpush1.msra.mxu0 0.0
    %511 = vmatprep.subr.mxu0 0.0
    %512 = vmatpush1.msra.mxu0 0.0
    %513 = vmatprep.subr.mxu0 0.0
    %514 = vmatpush1.msra.mxu0 0.0
    %515 = vmatprep.subr.mxu0 0.0
    %516 = vmatpush1.msra.mxu0 0.0
    %517 = vmatprep.subr.mxu0 0.0
    %518 = vmatpush1.msra.mxu0 0.0
    %519 = vmatprep.subr.mxu0 0.0
    %520 = vmatpush1.msra.mxu0 0.0
    %521 = vmatprep.subr.mxu0 0.0
    %522 = vmatpush1.msra.mxu0 0.0
    %523 = vmatprep.subr.mxu0 0.0
    %524 = vmatpush1.msra.mxu0 0.0
    %525 = vmatprep.subr.mxu0 0.0
    %526 = vmatpush1.msra.mxu0 0.0
    %527 = vmatprep.subr.mxu0 0.0
    %528 = vmatpush1.msra.mxu0 0.0
    %529 = vmatprep.subr.mxu0 0.0
    %530 = vmatpush1.msra.mxu0 0.0
    %531 = vmatprep.subr.mxu0 0.0
    %532 = vmatpush1.msra.mxu0 0.0
    %533 = vmatprep.subr.mxu0 0.0
    %534 = vmatpush1.msra.mxu0 0.0
    %535 = vmatprep.subr.mxu0 0.0
    %536 = vmatpush1.msra.mxu0 0.0
    %537 = vmatprep.subr.mxu0 0.0
    %538 = vmatpush1.msra.mxu0 0.0
    %539 = vmatprep.subr.mxu0 0.0
    %540 = vmatpush1.msra.mxu0 0.0
    %541 = vmatprep.subr.mxu0 0.0
    %542 = vmatpush1.msra.mxu0 0.0
    %543 = vmatprep.subr.mxu0 0.0
    %544 = vmatpush1.msra.mxu0 0.0
    %545 = vmatprep.subr.mxu0 0.0
    %546 = vmatpush1.msra.mxu0 0.0
    %547 = vmatprep.subr.mxu0 0.0
    %548 = vmatpush1.msra.mxu0 0.0
    %549 = vmatprep.subr.mxu0 0.0
    %550 = vmatpush1.msra.mxu0 0.0
    %551 = vmatprep.subr.mxu0 0.0
    %552 = vmatpush1.msra.mxu0 0.0
    %553 = vmatprep.subr.mxu0 0.0
    %554 = vmatpush1.msra.mxu0 0.0
    %555 = vmatprep.subr.mxu0 0.0
    %556 = vmatpush1.msra.mxu0 0.0
    %557 = vmatprep.subr.mxu0 0.0
    %558 = vmatpush1.msra.mxu0 0.0
    %559 = vmatprep.subr.mxu0 0.0
    %560 = vmatpush1.msra.mxu0 0.0
    %561 = vmatprep.subr.mxu0 0.0
    %562 = vmatpush1.msra.mxu0 0.0
    %563 = vmatprep.mubr.f32.mxu0 0.0
    %564 = vmatmul.mubr.f32.gmra.mrb[0].mxu0 %v494
    %v565 = vpop.f32.mrb[0].mxu0
    %v566 = vadd.f32 %v481, %v565
    %v567 = vpop.f32.mrb[0].mxu0
    %v568 = vadd.f32 %v485, %v567
    %569 = vmatprep.mubr.f32.mxu0 0.0
    %570 = vmatmul.mubr.f32.gmra.mrb[0].mxu0 %v497
    %v571 = vpop.f32.mrb[0].mxu0
    %v572 = vadd.f32 %v481, %v571
    %v573 = vpop.f32.mrb[0].mxu0
    %v574 = vadd.f32 %v485, %v573
    %575 = vdwg.mxu0
    %576 = vmatprep.subr.mxu0 0.0
    %577 = vmatpush1.msra.mxu0 %v466
    %578 = vmatprep.subr.mxu0 0.0
    %579 = vmatpush1.msra.mxu0 %v469
    %580 = vmatprep.subr.mxu0 0.0
    %581 = vmatpush1.msra.mxu0 %v472
    %582 = vmatprep.subr.mxu0 0.0
    %583 = vmatpush1.msra.mxu0 %v475
    %584 = vmatprep.subr.mxu0 0.0
    %585 = vmatpush1.msra.mxu0 0.0
    %586 = vmatprep.subr.mxu0 0.0
    %587 = vmatpush1.msra.mxu0 0.0
    %588 = vmatprep.subr.mxu0 0.0
    %589 = vmatpush1.msra.mxu0 0.0
    %590 = vmatprep.subr.mxu0 0.0
    %591 = vmatpush1.msra.mxu0 0.0
    %592 = vmatprep.subr.mxu0 0.0
    %593 = vmatpush1.msra.mxu0 0.0
    %594 = vmatprep.subr.mxu0 0.0
    %595 = vmatpush1.msra.mxu0 0.0
    %596 = vmatprep.subr.mxu0 0.0
    %597 = vmatpush1.msra.mxu0 0.0
    %598 = vmatprep.subr.mxu0 0.0
    %599 = vmatpush1.msra.mxu0 0.0
    %600 = vmatprep.subr.mxu0 0.0
    %601 = vmatpush1.msra.mxu0 0.0
    %602 = vmatprep.subr.mxu0 0.0
    %603 = vmatpush1.msra.mxu0 0.0
    %604 = vmatprep.subr.mxu0 0.0
    %605 = vmatpush1.msra.mxu0 0.0
    %606 = vmatprep.subr.mxu0 0.0
    %607 = vmatpush1.msra.mxu0 0.0
    %608 = vmatprep.subr.mxu0 0.0
    %609 = vmatpush1.msra.mxu0 0.0
    %610 = vmatprep.subr.mxu0 0.0
    %611 = vmatpush1.msra.mxu0 0.0
    %612 = vmatprep.subr.mxu0 0.0
    %613 = vmatpush1.msra.mxu0 0.0
    %614 = vmatprep.subr.mxu0 0.0
    %615 = vmatpush1.msra.mxu0 0.0
    %616 = vmatprep.subr.mxu0 0.0
    %617 = vmatpush1.msra.mxu0 0.0
    %618 = vmatprep.subr.mxu0 0.0
    %619 = vmatpush1.msra.mxu0 0.0
    %620 = vmatprep.subr.mxu0 0.0
    %621 = vmatpush1.msra.mxu0 0.0
    %622 = vmatprep.subr.mxu0 0.0
    %623 = vmatpush1.msra.mxu0 0.0
    %624 = vmatprep.subr.mxu0 0.0
    %625 = vmatpush1.msra.mxu0 0.0
    %626 = vmatprep.subr.mxu0 0.0
    %627 = vmatpush1.msra.mxu0 0.0
    %628 = vmatprep.subr.mxu0 0.0
    %629 = vmatpush1.msra.mxu0 0.0
    %630 = vmatprep.subr.mxu0 0.0
    %631 = vmatpush1.msra.mxu0 0.0
    %632 = vmatprep.subr.mxu0 0.0
    %633 = vmatpush1.msra.mxu0 0.0
    %634 = vmatprep.subr.mxu0 0.0
    %635 = vmatpush1.msra.mxu0 0.0
    %636 = vmatprep.subr.mxu0 0.0
    %637 = vmatpush1.msra.mxu0 0.0
    %638 = vmatprep.subr.mxu0 0.0
    %639 = vmatpush1.msra.mxu0 0.0
    %640 = vmatprep.mubr.f32.mxu0 0.0
    %641 = vmatmul.mubr.f32.gmra.mrb[0].mxu0 %v494
    %v642 = vpop.f32.mrb[0].mxu0
    %v643 = vadd.f32 %v489, %v642
    %v644 = vpop.f32.mrb[0].mxu0
    %645 = vmatprep.mubr.f32.mxu0 0.0
    %646 = vmatmul.mubr.f32.gmra.mrb[0].mxu0 %v497
    %v647 = vpop.f32.mrb[0].mxu0
    %v648 = vadd.f32 %v489, %v647
    %v649 = vpop.f32.mrb[0].mxu0
    %650 = vdwg.mxu0
    %v651 = vadd.f32 %v302, %v566
    %v652 = vadd.f32 %v308, %v572
    %v653 = vxor.u32 %v651, 2147483648
    %v654 = vxor.u32 %v652, 2147483648
    %v655 = vmul.f32 %v653, 1.442695
    %v656 = vpow.pop %v655
    %v657 = vmul.f32 %v654, 1.442695
    %v658 = vpow.pop %v657
    %v659 = vadd.f32 %v656, 1.0
    %v660 = vadd.f32 %v658, 1.0
    %v661 = vrcp.pop %v659
    %v662 = vmul.f32 1.0, %v661
    %v663 = vrcp.pop %v660
    %v664 = vmul.f32 1.0, %v663
    %v665 = vadd.f32 %v304, %v568
    %v666 = vadd.f32 %v310, %v574
    %v667 = vxor.u32 %v665, 2147483648
    %v668 = vxor.u32 %v666, 2147483648
    %v669 = vmul.f32 %v667, 1.442695
    %v670 = vpow.pop %v669
    %v671 = vmul.f32 %v668, 1.442695
    %v672 = vpow.pop %v671
    %v673 = vadd.f32 %v670, 1.0
    %v674 = vadd.f32 %v672, 1.0
    %v675 = vrcp.pop %v673
    %v676 = vmul.f32 1.0, %v675
    %v677 = vrcp.pop %v674
    %v678 = vmul.f32 1.0, %v677
    %v679 = vmul.f32 %v662, %v643
    %v680 = vmul.f32 %v664, %v648
    %v681 = vadd.f32 %v379, %v679
    %v682 = vadd.f32 %v385, %v680
    %v683 = vtanh.pop %v681
    %v684 = vtanh.pop %v682
    %v685 = vsub.f32 1.0, %v676
    %v686 = vsub.f32 1.0, %v678
    %v687 = vmul.f32 %v685, %v683
    %v688 = vmul.f32 %v686, %v684
    %v689 = vmul.f32 %v676, %v128
    %v690 = vmul.f32 %v678, %v129
    %v691 = vadd.f32 %v687, %v689
    %v692 = vadd.f32 %v688, %v690
    %v693 = vld [vmem:[#allocation6] sm:$0xff]
    %v694 = vld [vmem:[#allocation6 + $0x8] sm:$0xff]
    %695 = vset.pattern.permute.xlu0 1
    %696 = vperm.xlu0 %695, %v140
    %v697 = vpop.permute.xlu0 %696
    %699 = vset.pattern.permute.xlu0 1
    %700 = vperm.xlu0 %699, %v141
    %v701 = vpop.permute.xlu0 %700
    %v703 = vmul.f32 %v697, %v693
    %v704 = vmul.f32 %v701, %v694
    %v705 = vld [vmem:[#allocation8] sm:$0xff]
    %v706 = vld [vmem:[#allocation8 + $0x8] sm:$0xff]
    %707 = vset.pattern.permute.xlu0 2
    %708 = vperm.xlu0 %707, %v140
    %v709 = vpop.permute.xlu0 %708
    %711 = vset.pattern.permute.xlu0 2
    %712 = vperm.xlu0 %711, %v141
    %v713 = vpop.permute.xlu0 %712
    %v715 = vmul.f32 %v709, %v705
    %v716 = vmul.f32 %v713, %v706
    %v717 = vadd.f32 %v703, %v715
    %v718 = vadd.f32 %v704, %v716
    %v719 = vld [vmem:[%s10] sm:$0xff]
    %v720 = vld [vmem:[%s10 + $0x8] sm:$0xff]
    %v721 = vld [vmem:[%s10 + $0x10] sm:$0xff]
    %v722 = vld [vmem:[%s10 + $0x18] sm:$0xff]
    %v723 = vld [vmem:[%s11] sm:$0x1]
    %v725 = vlaneseq
    %v726 = vshrl.u32 %v725, 7
    %v727 = vsub.s32 0, %v726
    %v728 = vrot.slane %v723, %v727
    %v731 = vsel %vm228, %v717, 0
    %v734 = vsel %vm228, %v718, 0
    %736 = vmatprep.subr.mxu0 0.0
    %737 = vmatpush1.msra.mxu0 %v719
    %738 = vmatprep.subr.mxu0 0.0
    %739 = vmatpush1.msra.mxu0 %v720
    %740 = vmatprep.subr.mxu0 0.0
    %741 = vmatpush1.msra.mxu0 %v721
    %742 = vmatprep.subr.mxu0 0.0
    %743 = vmatpush1.msra.mxu0 %v722
    %744 = vmatprep.subr.mxu0 0.0
    %745 = vmatpush1.msra.mxu0 0.0
    %746 = vmatprep.subr.mxu0 0.0
    %747 = vmatpush1.msra.mxu0 0.0
    %748 = vmatprep.subr.mxu0 0.0
    %749 = vmatpush1.msra.mxu0 0.0
    %750 = vmatprep.subr.mxu0 0.0
    %751 = vmatpush1.msra.mxu0 0.0
    %752 = vmatprep.subr.mxu0 0.0
    %753 = vmatpush1.msra.mxu0 0.0
    %754 = vmatprep.subr.mxu0 0.0
    %755 = vmatpush1.msra.mxu0 0.0
    %756 = vmatprep.subr.mxu0 0.0
    %757 = vmatpush1.msra.mxu0 0.0
    %758 = vmatprep.subr.mxu0 0.0
    %759 = vmatpush1.msra.mxu0 0.0
    %760 = vmatprep.subr.mxu0 0.0
    %761 = vmatpush1.msra.mxu0 0.0
    %762 = vmatprep.subr.mxu0 0.0
    %763 = vmatpush1.msra.mxu0 0.0
    %764 = vmatprep.subr.mxu0 0.0
    %765 = vmatpush1.msra.mxu0 0.0
    %766 = vmatprep.subr.mxu0 0.0
    %767 = vmatpush1.msra.mxu0 0.0
    %768 = vmatprep.subr.mxu0 0.0
    %769 = vmatpush1.msra.mxu0 0.0
    %770 = vmatprep.subr.mxu0 0.0
    %771 = vmatpush1.msra.mxu0 0.0
    %772 = vmatprep.subr.mxu0 0.0
    %773 = vmatpush1.msra.mxu0 0.0
    %774 = vmatprep.subr.mxu0 0.0
    %775 = vmatpush1.msra.mxu0 0.0
    %776 = vmatprep.subr.mxu0 0.0
    %777 = vmatpush1.msra.mxu0 0.0
    %778 = vmatprep.subr.mxu0 0.0
    %779 = vmatpush1.msra.mxu0 0.0
    %780 = vmatprep.subr.mxu0 0.0
    %781 = vmatpush1.msra.mxu0 0.0
    %782 = vmatprep.subr.mxu0 0.0
    %783 = vmatpush1.msra.mxu0 0.0
    %784 = vmatprep.subr.mxu0 0.0
    %785 = vmatpush1.msra.mxu0 0.0
    %786 = vmatprep.subr.mxu0 0.0
    %787 = vmatpush1.msra.mxu0 0.0
    %788 = vmatprep.subr.mxu0 0.0
    %789 = vmatpush1.msra.mxu0 0.0
    %790 = vmatprep.subr.mxu0 0.0
    %791 = vmatpush1.msra.mxu0 0.0
    %792 = vmatprep.subr.mxu0 0.0
    %793 = vmatpush1.msra.mxu0 0.0
    %794 = vmatprep.subr.mxu0 0.0
    %795 = vmatpush1.msra.mxu0 0.0
    %796 = vmatprep.subr.mxu0 0.0
    %797 = vmatpush1.msra.mxu0 0.0
    %798 = vmatprep.subr.mxu0 0.0
    %799 = vmatpush1.msra.mxu0 0.0
    %800 = vmatprep.mubr.f32.mxu0 0.0
    %801 = vmatmul.mubr.f32.gmra.mrb[0].mxu0 %v731
    %v802 = vpop.f32.mrb[0].mxu0
    %v803 = vadd.f32 %v728, %v802
    %v804 = vpop.f32.mrb[0].mxu0
    %805 = vmatprep.mubr.f32.mxu0 0.0
    %806 = vmatmul.mubr.f32.gmra.mrb[0].mxu0 %v734
    %v807 = vpop.f32.mrb[0].mxu0
    %v808 = vadd.f32 %v728, %v807
    %v809 = vpop.f32.mrb[0].mxu0
    %810 = vdwg.mxu0
    %v812 = vsel %vm171, %v803, 0
    %v815 = vsel %vm171, %v808, 0
    %v818 = vsel %vm171, %v381, 0
    %v821 = vsel %vm171, %v387, 0
    %823 = vmatprep.subr.mxu0 0.0
    %824 = vmatpush1.xpose.msra.mxu0 %v818
    %825 = vmatprep.subr.mxu0 0.0
    %826 = vmatpush1.xpose.msra.mxu0 %v821
    %827 = vmatprep.subr.mxu0 0.0
    %828 = vmatpush1.xpose.msra.mxu0 0.0
    %829 = vmatprep.subr.mxu0 0.0
    %830 = vmatpush1.xpose.msra.mxu0 0.0
    %831 = vmatprep.subr.mxu0 0.0
    %832 = vmatpush1.xpose.msra.mxu0 0.0
    %833 = vmatprep.subr.mxu0 0.0
    %834 = vmatpush1.xpose.msra.mxu0 0.0
    %835 = vmatprep.subr.mxu0 0.0
    %836 = vmatpush1.xpose.msra.mxu0 0.0
    %837 = vmatprep.subr.mxu0 0.0
    %838 = vmatpush1.xpose.msra.mxu0 0.0
    %839 = vmatprep.subr.mxu0 0.0
    %840 = vmatpush1.xpose.msra.mxu0 0.0
    %841 = vmatprep.subr.mxu0 0.0
    %842 = vmatpush1.xpose.msra.mxu0 0.0
    %843 = vmatprep.subr.mxu0 0.0
    %844 = vmatpush1.xpose.msra.mxu0 0.0
    %845 = vmatprep.subr.mxu0 0.0
    %846 = vmatpush1.xpose.msra.mxu0 0.0
    %847 = vmatprep.subr.mxu0 0.0
    %848 = vmatpush1.xpose.msra.mxu0 0.0
    %849 = vmatprep.subr.mxu0 0.0
    %850 = vmatpush1.xpose.msra.mxu0 0.0
    %851 = vmatprep.subr.mxu0 0.0
    %852 = vmatpush1.xpose.msra.mxu0 0.0
    %853 = vmatprep.subr.mxu0 0.0
    %854 = vmatpush1.xpose.msra.mxu0 0.0
    %855 = vmatprep.subr.mxu0 0.0
    %856 = vmatpush1.xpose.msra.mxu0 0.0
    %857 = vmatprep.subr.mxu0 0.0
    %858 = vmatpush1.xpose.msra.mxu0 0.0
    %859 = vmatprep.subr.mxu0 0.0
    %860 = vmatpush1.xpose.msra.mxu0 0.0
    %861 = vmatprep.subr.mxu0 0.0
    %862 = vmatpush1.xpose.msra.mxu0 0.0
    %863 = vmatprep.subr.mxu0 0.0
    %864 = vmatpush1.xpose.msra.mxu0 0.0
    %865 = vmatprep.subr.mxu0 0.0
    %866 = vmatpush1.xpose.msra.mxu0 0.0
    %867 = vmatprep.subr.mxu0 0.0
    %868 = vmatpush1.xpose.msra.mxu0 0.0
    %869 = vmatprep.subr.mxu0 0.0
    %870 = vmatpush1.xpose.msra.mxu0 0.0
    %871 = vmatprep.subr.mxu0 0.0
    %872 = vmatpush1.xpose.msra.mxu0 0.0
    %873 = vmatprep.subr.mxu0 0.0
    %874 = vmatpush1.xpose.msra.mxu0 0.0
    %875 = vmatprep.subr.mxu0 0.0
    %876 = vmatpush1.xpose.msra.mxu0 0.0
    %877 = vmatprep.subr.mxu0 0.0
    %878 = vmatpush1.xpose.msra.mxu0 0.0
    %879 = vmatprep.subr.mxu0 0.0
    %880 = vmatpush1.xpose.msra.mxu0 0.0
    %881 = vmatprep.subr.mxu0 0.0
    %882 = vmatpush1.xpose.msra.mxu0 0.0
    %883 = vmatprep.subr.mxu0 0.0
    %884 = vmatpush1.xpose.msra.mxu0 0.0
    %885 = vmatprep.subr.mxu0 0.0
    %886 = vmatpush1.xpose.msra.mxu0 0.0
    %887 = vmatprep.mubr.f32.mxu0 0.0
    %888 = vmatmul.mubr.f32.gmra.mrb[0].mxu0 %v812
    %v889 = vpop.f32.mrb[0].mxu0
    %v890 = vadd.f32 0.0, %v889
    %v891 = vpop.f32.mrb[0].mxu0
    %892 = vmatprep.mubr.f32.mxu0 0.0
    %893 = vmatmul.mubr.f32.gmra.mrb[0].mxu0 %v815
    %v894 = vpop.f32.mrb[0].mxu0
    %v895 = vadd.f32 0.0, %v894
    %v896 = vpop.f32.mrb[0].mxu0
    %897 = vdwg.mxu0
    %v898 = vmul.f32 %v890, 0.25
    %v899 = vmul.f32 %v895, 0.25
    %vm900 = vcmp.gt.f32.partialorder %v180, 0.0
    %v901 = vsel %vm900, 1, 0
    %vm902 = vcmp.eq.s32.totalorder %v901, 1
    %v903 = vsel %vm902, %v898, -1e+30
    %v904 = vsel %vm902, %v899, -1e+30
    %v905 = vsel %vm171, %v903, -inf
    %906 = vmax.xlane.f32.xlu0 %v905
    %v907 = vpop.xlane.xlu0 %906
    %v908 = vsel %vm171, %v904, -inf
    %909 = vmax.xlane.f32.xlu0 %v908
    %v910 = vpop.xlane.xlu0 %909
    %v911 = vsub.f32 %v903, %v907
    %v912 = vsub.f32 %v904, %v910
    %v913 = vmul.f32 %v911, 1.442695
    %v914 = vpow.pop %v913
    %v915 = vmul.f32 %v912, 1.442695
    %v916 = vpow.pop %v915
    %v917 = vsel %vm171, %v914, 0.0
    %918 = vadd.xlane.f32.xlu0 %v917
    %v919 = vpop.xlane.xlu0 %918
    %v920 = vsel %vm171, %v916, 0.0
    %921 = vadd.xlane.f32.xlu0 %v920
    %v922 = vpop.xlane.xlu0 %921
    %vm923 = vcmp.gt.f32.partialorder %v919, 0.0
    %vm924 = vcmp.gt.f32.partialorder %v922, 0.0
    %v925 = vsel %vm923, %v919, 1.0
    %v926 = vsel %vm924, %v922, 1.0
    %v927 = vrcp.pop %v925
    %v928 = vrcp.pop %v926
    %v929 = vmul.f32 %v914, %v927
    %v930 = vmul.f32 %v916, %v928
    %v932 = vsel %vm171, %v929, 0
    %v935 = vsel %vm171, %v930, 0
    %937 = vmatprep.subr.mxu0 0.0
    %938 = vmatpush1.msra.mxu0 %v456
    %939 = vmatprep.subr.mxu0 0.0
    %940 = vmatpush1.msra.mxu0 %v461
    %941 = vmatprep.subr.mxu0 0.0
    %942 = vmatpush1.msra.mxu0 0.0
    %943 = vmatprep.subr.mxu0 0.0
    %944 = vmatpush1.msra.mxu0 0.0
    %945 = vmatprep.subr.mxu0 0.0
    %946 = vmatpush1.msra.mxu0 0.0
    %947 = vmatprep.subr.mxu0 0.0
    %948 = vmatpush1.msra.mxu0 0.0
    %949 = vmatprep.subr.mxu0 0.0
    %950 = vmatpush1.msra.mxu0 0.0
    %951 = vmatprep.subr.mxu0 0.0
    %952 = vmatpush1.msra.mxu0 0.0
    %953 = vmatprep.subr.mxu0 0.0
    %954 = vmatpush1.msra.mxu0 0.0
    %955 = vmatprep.subr.mxu0 0.0
    %956 = vmatpush1.msra.mxu0 0.0
    %957 = vmatprep.subr.mxu0 0.0
    %958 = vmatpush1.msra.mxu0 0.0
    %959 = vmatprep.subr.mxu0 0.0
    %960 = vmatpush1.msra.mxu0 0.0
    %961 = vmatprep.subr.mxu0 0.0
    %962 = vmatpush1.msra.mxu0 0.0
    %963 = vmatprep.subr.mxu0 0.0
    %964 = vmatpush1.msra.mxu0 0.0
    %965 = vmatprep.subr.mxu0 0.0
    %966 = vmatpush1.msra.mxu0 0.0
    %967 = vmatprep.subr.mxu0 0.0
    %968 = vmatpush1.msra.mxu0 0.0
    %969 = vmatprep.subr.mxu0 0.0
    %970 = vmatpush1.msra.mxu0 0.0
    %971 = vmatprep.subr.mxu0 0.0
    %972 = vmatpush1.msra.mxu0 0.0
    %973 = vmatprep.subr.mxu0 0.0
    %974 = vmatpush1.msra.mxu0 0.0
    %975 = vmatprep.subr.mxu0 0.0
    %976 = vmatpush1.msra.mxu0 0.0
    %977 = vmatprep.subr.mxu0 0.0
    %978 = vmatpush1.msra.mxu0 0.0
    %979 = vmatprep.subr.mxu0 0.0
    %980 = vmatpush1.msra.mxu0 0.0
    %981 = vmatprep.subr.mxu0 0.0
    %982 = vmatpush1.msra.mxu0 0.0
    %983 = vmatprep.subr.mxu0 0.0
    %984 = vmatpush1.msra.mxu0 0.0
    %985 = vmatprep.subr.mxu0 0.0
    %986 = vmatpush1.msra.mxu0 0.0
    %987 = vmatprep.subr.mxu0 0.0
    %988 = vmatpush1.msra.mxu0 0.0
    %989 = vmatprep.subr.mxu0 0.0
    %990 = vmatpush1.msra.mxu0 0.0
    %991 = vmatprep.subr.mxu0 0.0
    %992 = vmatpush1.msra.mxu0 0.0
    %993 = vmatprep.subr.mxu0 0.0
    %994 = vmatpush1.msra.mxu0 0.0
    %995 = vmatprep.subr.mxu0 0.0
    %996 = vmatpush1.msra.mxu0 0.0
    %997 = vmatprep.subr.mxu0 0.0
    %998 = vmatpush1.msra.mxu0 0.0
    %999 = vmatprep.subr.mxu0 0.0
    %1000 = vmatpush1.msra.mxu0 0.0
    %1001 = vmatprep.mubr.f32.mxu0 0.0
    %1002 = vmatmul.mubr.f32.gmra.mrb[0].mxu0 %v932
    %v1003 = vpop.f32.mrb[0].mxu0
    %v1004 = vadd.f32 0.0, %v1003
    %v1005 = vpop.f32.mrb[0].mxu0
    %1006 = vmatprep.mubr.f32.mxu0 0.0
    %1007 = vmatmul.mubr.f32.gmra.mrb[0].mxu0 %v935
    %v1008 = vpop.f32.mrb[0].mxu0
    %v1009 = vadd.f32 0.0, %v1008
    %v1010 = vpop.f32.mrb[0].mxu0
    %1011 = vdwg.mxu0
    %v1012 = vtanh.pop %v1004
    %v1013 = vtanh.pop %v1009
    %vm1014 = vcmp.gt.f32.partialorder %v150, 0.0
    %vm1015 = vcmp.gt.f32.partialorder %v151, 0.0
    %vm1016 = vcmp.gt.f32.partialorder %v137, 0.0
    %vm1017 = vcmp.gt.f32.partialorder %v138, 0.0
    %v1018 = vsel %vm1016, 1, 0
    %v1019 = vsel %vm1017, 1, 0
    %1020 = vset.pattern.permute.xlu0 0
    %1021 = vperm.xlu0 %1020, %v1018
    %v1022 = vpop.permute.xlu0 %1021
    %1023 = vset.pattern.permute.xlu0 0
    %1024 = vperm.xlu0 %1023, %v1019
    %v1025 = vpop.permute.xlu0 %1024
    %vm1026 = vcmp.eq.s32.totalorder %v1022, 1
    %vm1027 = vcmp.eq.s32.totalorder %v1025, 1
    %v1028 = vsel %vm1026, %v691, 0.0
    %v1029 = vsel %vm1027, %v692, 0.0
    %v1030 = vsel %vm1014, 1, 0
    %v1031 = vsel %vm1015, 1, 0
    %1032 = vset.pattern.permute.xlu0 1
    %1033 = vperm.xlu0 %1032, %v1030
    %v1034 = vpop.permute.xlu0 %1033
    %1035 = vset.pattern.permute.xlu0 1
    %1036 = vperm.xlu0 %1035, %v1031
    %v1037 = vpop.permute.xlu0 %1036
    %vm1038 = vcmp.eq.s32.totalorder %v1034, 1
    %vm1039 = vcmp.eq.s32.totalorder %v1037, 1
    %v1040 = vsel %vm1038, %v1012, %v1028
    %v1041 = vsel %vm1039, %v1013, %v1029
    %1042 = vst.msk [vmem:[#allocation15] sm:$0xff] %vm228, %v1040
    %1043 = vst.msk [vmem:[#allocation15 + $0x8] sm:$0xff] %vm228, %v1041
    %v1044 = vsel %vm1026, %v691, -1e+30
    %v1045 = vsel %vm1027, %v692, -1e+30
    %v1046 = vsel %vm228, %v1044, -inf
    %v1047 = vsel %vm228, %v1045, -inf
    %v1048 = vmax.f32 %v1046, %v1047
    %v1049 = vrot.slane %v1048, 4
    %v1050 = vmax.f32 %v1048, %v1049
    %v1051 = vrot.slane %v1050, 2
    %v1052 = vmax.f32 %v1050, %v1051
    %v1053 = vrot.slane %v1052, 1
    %v1054 = vmax.f32 %v1052, %v1053
    %v1055 = vsel %vm1038, %v1012, -1e+30
    %v1056 = vsel %vm1039, %v1013, -1e+30
    %v1057 = vsel %vm228, %v1055, -inf
    %v1058 = vsel %vm228, %v1056, -inf
    %v1059 = vmax.f32 %v1057, %v1058
    %v1060 = vrot.slane %v1059, 4
    %v1061 = vmax.f32 %v1059, %v1060
    %v1062 = vrot.slane %v1061, 2
    %v1063 = vmax.f32 %v1061, %v1062
    %v1064 = vrot.slane %v1063, 1
    %v1065 = vmax.f32 %v1063, %v1064
    %v1066 = vmax.f32 %v1054, %v1065
    %vm1067 = vcmask 7168
    %v1068 = vsel %vm1067, %v137, 0.0
    %v1069 = vsel %vm1067, %v138, 0.0
    %v1070 = vadd.f32 %v1068, %v1069
    %1071 = vadd.xlane.f32.xlu0 %v1070
    %v1072 = vpop.xlane.xlu0 %1071
    %v1073 = vrot.slane %v1072, 4
    %v1074 = vadd.f32 %v1072, %v1073
    %v1075 = vrot.slane %v1074, 2
    %v1076 = vadd.f32 %v1074, %v1075
    %v1077 = vrot.slane %v1076, 1
    %v1078 = vadd.f32 %v1076, %v1077
    %s1079 = vtos %v1078
    %1080 = vrot.lane.b32.xlu0 %v150, 127
    %v1081 = vpop.permute.xlu0 %1080
    %1082 = vrot.lane.b32.xlu0 %v151, 127
    %v1083 = vpop.permute.xlu0 %1082
    %v1086 = vsel %vm1067, %v1081, 0.0
    %v1087 = vsel %vm1067, %v1083, 0.0
    %v1088 = vadd.f32 %v1086, %v1087
    %1089 = vadd.xlane.f32.xlu0 %v1088
    %v1090 = vpop.xlane.xlu0 %1089
    %v1091 = vrot.slane %v1090, 4
    %v1092 = vadd.f32 %v1090, %v1091
    %v1093 = vrot.slane %v1092, 2
    %v1094 = vadd.f32 %v1092, %v1093
    %v1095 = vrot.slane %v1094, 1
    %v1096 = vadd.f32 %v1094, %v1095
    %s1097 = vtos %v1096
    %s1098 = sadd.f32 %s1079, %s1097
    %p1099 = scmp.gt.f32.partialorder %s1098, 0.0
    %s1100 = scalar_select %p1099, 1, 0
    %v1101 = vstv %s1100
    %vm1102 = vcmp.eq.s32.totalorder %v1101, 1
    %v1103 = vsel %vm1102, %v1066, 0.0
    %vm1104 = vcmask 253952
    %1105 = vst.msk [vmem:[#allocation14] sm:$0x1] %vm1104, %v1103
    // Predicated region
    $region74: #{tpu_custom_call.1} parent=1 // pred_check
      _
    $region75: #{tpu_custom_call.1} parent=1 // pred_check_branch
      %1107 = sbr.rel (0) target = $region77
    $region76: #{tpu_custom_call.1} parent=1 // pred_region
      %s1109 = ssub.s32 16, 16
      %1110 = vsyncadd [#allocation5], %s1109
      %s1112 = sshll.u32 [#allocation14], 4
      %s1113 = int_to_ptr.vmem [resolvable:$true] %s1112
      %1115 = dma.vmem_to_hbm [thread:$0]  %s1113, 16, %s12, [#allocation5]
    $region77: #{tpu_custom_call.1} parent=1 // pred_fallthru
      _
    // Predicated region
    $region78: #{tpu_custom_call.1} parent=1 // pred_check
      _
    $region79: #{tpu_custom_call.1} parent=1 // pred_check_branch
      %1117 = sbr.rel (0) target = $region81
    $region80: #{tpu_custom_call.1} parent=1 // pred_region
      %s1119 = ssub.s32 256, 256
      %1120 = vsyncadd [#allocation16], %s1119
      %s1121 = sshll.u32 [#allocation15], 4
      %s1122 = int_to_ptr.vmem [resolvable:$true] %s1121
      %1127 = dma.vmem_to_hbm [thread:$0]  %s1122, 256, %s13, [#allocation16], 128, 128, 8
    $region81: #{tpu_custom_call.1} parent=1 // pred_fallthru
      _
    // Predicated region
    $region82: #{tpu_custom_call.1} parent=1 // pred_check
      _
    $region83: #{tpu_custom_call.1} parent=1 // pred_check_branch
      %1129 = sbr.rel (0) target = $region85
    $region84: #{tpu_custom_call.1} parent=1 // pred_region
      %1130 = dma.done [#allocation5], 16
    $region85: #{tpu_custom_call.1} parent=1 // pred_fallthru
      _
    // Predicated region
    $region86: #{tpu_custom_call.1} parent=1 // pred_check
      _
    $region87: #{tpu_custom_call.1} parent=1 // pred_check_branch
      %1132 = sbr.rel (0) target = $region89
    $region88: #{tpu_custom_call.1} parent=1 // pred_region
      %1133 = dma.done [#allocation16], 256
    $region89: #{tpu_custom_call.1} parent=1 // pred_fallthru
      _
    %1134 = vsyncpa [#allocation4], 1
    %1135 = vsyncpa [#allocation7], 1
    %1136 = vsyncpa [#allocation10], 1
    %1137 = vsyncpa [#allocation13], 1
    %1138 = vsyncpa [#allocation5], 1
    %1139 = vsyncpa [#allocation16], 1

</llo_original>
